<compile_context>
chip_gen: v5e
topology: v5e:2x2
jax: 0.10.0
libtpu: 0.0.40
codegen_flags: <defaults>
</compile_context>

<pallas_src>
import jax
import jax.numpy as jnp
from jax.experimental import pallas as pl
from jax.experimental.pallas import tpu as pltpu

LN_EPS = 1e-5


def _round_up(x, m):
    return ((x + m - 1) // m) * m


def _vmem_capacity_bytes():
    """Physical VMEM per TensorCore; conservative fallback if the query is unavailable."""
    try:
        return int(pltpu.get_tpu_info().vmem_capacity_bytes)
    except Exception:
        return 64 * 2**20  # v7x-sized conservative default


def _make_mlp_kernel(depth):
    """Builds a fused MLP kernel for a given (static) depth."""

    def kernel(*refs):
        # refs layout:
        #   x_ref,                              (tb, in_pad)  bf16
        #   gamma_ref, beta_ref,                (shared LayerNorm affine, (1, width), f32)
        #   w0_ref, b0_ref,                     (in_pad -> width;  W bf16, b f32)
        #   [w_i_ref, b_i_ref] * (depth - 1),   (width -> width)
        #   wf_ref, bf_ref,                     (width -> padded output_dim)
        #   out_ref                             (tb, out_pad) f32
        x_ref = refs[0]
        out_ref = refs[-1]
        # Shared LN affine, read ONCE (hoisted out of the unrolled depth loop).
        gamma = refs[1][...]  # (1, width) f32
        beta = refs[2][...]   # (1, width) f32
        idx = 3

        # First linear + ReLU.  bf16 operands, f32 accumulation on the MXU.
        w0 = refs[idx][...]
        b0 = refs[idx + 1][...]
        idx += 2
        h32 = jnp.dot(x_ref[...], w0, preferred_element_type=jnp.float32) + b0
        h = jnp.maximum(h32, 0.0).astype(jnp.bfloat16)  # ReLU fused with bf16 cast

        # Hidden blocks: Linear -> LayerNorm(shared) -> ReLU -> Dropout(identity).
        # TODO(synk): switch to lax.fori_loop over stacked weights for large depth.
        for _ in range(depth - 1):
            w = refs[idx][...]
            b = refs[idx + 1][...]
            idx += 2
            h32 = jnp.dot(h, w, preferred_element_type=jnp.float32) + b
            # LayerNorm, plain form; variance via E[h^2] - mean^2 (XLU reductions,
            # one fewer full-tile VPU pass).  f32 math + eps keeps it numerically safe.
            mean = jnp.mean(h32, axis=-1, keepdims=True)
            mean_sq = jnp.mean(h32 * h32, axis=-1, keepdims=True)
            var = mean_sq - mean * mean
            inv = jax.lax.rsqrt(var + LN_EPS)
            hn = (h32 - mean) * inv
            hn = hn * gamma + beta
            h = jnp.maximum(hn, 0.0).astype(jnp.bfloat16)  # ReLU fused with bf16 cast
            # Dropout: identity at inference.

        # Output linear (lane-padded to a multiple of 128).
        wf = refs[idx][...]
        bfin = refs[idx + 1][...]
        out_ref[...] = (
            jnp.dot(h, wf, preferred_element_type=jnp.float32) + bfin
        ).astype(out_ref.dtype)

    return kernel


def mlp_forward(x, params, *, batch_tile=None, single_buffer_weights=True):
    """Run the fused MLP kernel.

    x:      [batch, input_dim] float32
    params: dict with keys 'gamma','beta','w0','b0','w_hidden' (list),'b_hidden' (list),
            'wf','bf'.  Weights are [in, out]; biases are [1, out]; gamma/beta are [1, width].
    """
    batch, input_dim = x.shape
    width = params["w0"].shape[1]
    output_dim = params["wf"].shape[1]
    depth = len(params["w_hidden"]) + 1

    vmem_cap = _vmem_capacity_bytes()

    # Generation-aware batch tile: bigger tiles amortize per-grid-step overhead where
    # VMEM allows (v5e/v6e 128 MiB); stay smaller on v7x (64 MiB).
    if batch_tile is None:
        batch_tile = 512 if vmem_cap >= 96 * 2**20 else 256

    # Lane-dense input: zero-pad x's last dim (and w0's rows) to a multiple of 128.
    in_pad = _round_up(max(input_dim, 128), 128)
    # Lane-dense output: pad the final projection to a multiple of 128 lanes;
    # the padded columns are sliced off outside the kernel.
    out_pad = _round_up(max(output_dim, 128), 128)

    x_p = jnp.pad(x, ((0, 0), (0, in_pad - input_dim))).astype(jnp.bfloat16)
    w0 = jnp.pad(params["w0"], ((0, in_pad - input_dim), (0, 0)))
    wf = jnp.pad(params["wf"], ((0, 0), (0, out_pad - output_dim)))
    bf = jnp.pad(params["bf"], ((0, 0), (0, out_pad - output_dim)))

    # Weights in bf16 (native MXU rate, half the resident-weight VMEM);
    # biases / LN affine stay f32 and are applied after f32 accumulation.
    bf16 = lambda w: w.astype(jnp.bfloat16)
    args = [x_p, params["gamma"], params["beta"], bf16(w0), params["b0"]]
    for w, b in zip(params["w_hidden"], params["b_hidden"]):
        args += [bf16(w), b]
    args += [bf16(wf), bf]

    # Batch tile: multiple of 8 sublanes; guarantee >= 2 grid steps when batch allows,
    # so "parallel" can shard across v7x's two TensorCores and DMA overlaps compute.
    if batch <= 8:
        tb = batch                                   # single tiny full-extent block
    elif batch <= 2 * batch_tile:
        tb = max(8, ((batch // 2) // 8) * 8)         # split into >= 2 steps
    else:
        tb = max(8, (batch_tile // 8) * 8)
    grid = (pl.cdiv(batch, tb),)

    def const_spec(arr):
        # Grid-invariant operand: whole array as one block, single-buffered
        # (double-buffering an invariant block only doubles VMEM footprint).
        nd = arr.ndim
        index_map = lambda i: (0,) * nd
        if single_buffer_weights:
            return pl.BlockSpec(arr.shape, index_map, pipeline_mode=pl.Buffered(1))
        return pl.BlockSpec(arr.shape, index_map)

    in_specs = [pl.BlockSpec((tb, in_pad), lambda i: (i, 0))]
    in_specs += [const_spec(a) for a in args[1:]]
    out_spec = pl.BlockSpec((tb, out_pad), lambda i: (i, 0))

    # Explicit VMEM budget: resident weights (x1 or x2 buffers) + double-buffered
    # x / out tiles + headroom for live f32/bf16 activation temporaries, capped at
    # the device's physical VMEM minus ~8 MiB.
    nbytes = lambda a: int(a.size) * a.dtype.itemsize
    weight_bufs = 1 if single_buffer_weights else 2
    resident = weight_bufs * sum(nbytes(a) for a in args[1:])
    streamed = 2 * tb * in_pad * 2 + 2 * tb * out_pad * 4     # bf16 x, f32 out
    act_temps = 8 * tb * max(width, in_pad, out_pad) * 4
    plan = resident + streamed + act_temps
    usable = max(16 * 2**20, vmem_cap - 8 * 2**20)
    vmem_limit = int(min(usable, max(32 * 2**20, 2 * plan)))

    kernel = _make_mlp_kernel(depth)
    out_padded = pl.pallas_call(
        kernel,
        out_shape=jax.ShapeDtypeStruct((batch, out_pad), jnp.float32),
        grid_spec=pltpu.PrefetchScalarGridSpec(
            num_scalar_prefetch=0,
            grid=grid,
            in_specs=in_specs,
            out_specs=out_spec,
        ),
        compiler_params=pltpu.CompilerParams(
            dimension_semantics=("parallel",),
            vmem_limit_bytes=vmem_limit,
        ),
    )(*args)
    return out_padded[:, :output_dim]


def init_params(key, input_dim, width, output_dim, depth):
    """Deterministic PyTorch-Linear-style init (uniform(-1/sqrt(fan_in), 1/sqrt(fan_in)))."""

    def linear(k, fan_in, fan_out):
        kw, kb = jax.random.split(k)
        bound = 1.0 / jnp.sqrt(fan_in)
        w = jax.random.uniform(kw, (fan_in, fan_out), jnp.float32, -bound, bound)
        b = jax.random.uniform(kb, (1, fan_out), jnp.float32, -bound, bound)
        return w, b

    keys = jax.random.split(key, depth + 1)
    w0, b0 = linear(keys[0], input_dim, width)
    w_hidden, b_hidden = [], []
    for i in range(depth - 1):
        w, b = linear(keys[1 + i], width, width)
        w_hidden.append(w)
        b_hidden.append(b)
    wf, bf = linear(keys[depth], width, output_dim)

    # Shared LayerNorm affine (PyTorch default init: weight=1, bias=0).
    gamma = jnp.ones((1, width), jnp.float32)
    beta = jnp.zeros((1, width), jnp.float32)

    return {
        "gamma": gamma,
        "beta": beta,
        "w0": w0,
        "b0": b0,
        "w_hidden": w_hidden,
        "b_hidden": b_hidden,
        "wf": wf,
        "bf": bf,
    }


def mlp_reference(x, params):
    """Pure-JAX f32 reference for correctness checking."""
    h = x @ params["w0"] + params["b0"]
    h = jnp.maximum(h, 0.0)
    for w, b in zip(params["w_hidden"], params["b_hidden"]):
        h = h @ w + b
        mean = jnp.mean(h, axis=-1, keepdims=True)
        var = jnp.mean(jnp.square(h - mean), axis=-1, keepdims=True)
        h = (h - mean) * jax.lax.rsqrt(var + LN_EPS)
        h = h * params["gamma"] + params["beta"]
        h = jnp.maximum(h, 0.0)
    return h @ params["wf"] + params["bf"]


if __name__ == "__main__":
    # Small shapes consistent with build_mlp(input_dim=64, output_dim=16,
    # depth=3, width=128, dropout=0.0, normalization='layernorm', activation='relu', ...)
    batch, input_dim, width, output_dim, depth = 64, 64, 128, 16, 3

    key = jax.random.PRNGKey(0)
    kx, kp = jax.random.split(key)
    x = jax.random.normal(kx, (batch, input_dim), jnp.float32)
    params = init_params(kp, input_dim, width, output_dim, depth)

    try:
        out = jax.block_until_ready(mlp_forward(x, params))
    except Exception:
        # Fallback for JAX versions without pl.Buffered / pipeline_mode support:
        # identical kernel, default (double-buffered) weight BlockSpecs; halve the
        # batch tile to compensate for the doubled resident-weight footprint.
        out = jax.block_until_ready(
            mlp_forward(x, params, batch_tile=128, single_buffer_weights=False)
        )

    ref = mlp_reference(x, params)
    assert out.shape == (batch, output_dim)
    max_err = float(jnp.max(jnp.abs(out - ref)))
    # bf16 matmul operands (x and W) vs f32 reference -> loosened tolerance.
    assert jnp.allclose(out, ref, atol=7.5e-2, rtol=7.5e-2), (
        f"mismatch vs reference, max_err={max_err}"
    )

    print("KERNEL_OK")
</pallas_src>

<mosaic_0001>
module attributes {stable_mosaic.version = 11 : i64} {
  func.func @kernel(%arg0: i32, %arg1: memref<32x128xbf16, #tpu.memory_space<vmem>>, %arg2: memref<1x128xf32, #tpu.memory_space<vmem>>, %arg3: memref<1x128xf32, #tpu.memory_space<vmem>>, %arg4: memref<128x128xbf16, #tpu.memory_space<vmem>>, %arg5: memref<1x128xf32, #tpu.memory_space<vmem>>, %arg6: memref<128x128xbf16, #tpu.memory_space<vmem>>, %arg7: memref<1x128xf32, #tpu.memory_space<vmem>>, %arg8: memref<128x128xbf16, #tpu.memory_space<vmem>>, %arg9: memref<1x128xf32, #tpu.memory_space<vmem>>, %arg10: memref<128x128xbf16, #tpu.memory_space<vmem>>, %arg11: memref<1x128xf32, #tpu.memory_space<vmem>>, %arg12: memref<32x128xf32, #tpu.memory_space<vmem>>) attributes {dimension_semantics = [#tpu.dimension_semantics<parallel>], iteration_bounds = array<i64: 2>, scalar_prefetch = 0 : i64, scratch_operands = 0 : i64, tpu.core_type = #tpu.core_type<tc>, window_params = [{transform_indices = @transform_0, window_bounds = array<i64: 32, 128>}, {pipeline_mode = #tpu.pipeline_mode<synchronous>, transform_indices = @transform_1, window_bounds = array<i64: 1, 128>}, {pipeline_mode = #tpu.pipeline_mode<synchronous>, transform_indices = @transform_2, window_bounds = array<i64: 1, 128>}, {pipeline_mode = #tpu.pipeline_mode<synchronous>, transform_indices = @transform_3, window_bounds = array<i64: 128, 128>}, {pipeline_mode = #tpu.pipeline_mode<synchronous>, transform_indices = @transform_4, window_bounds = array<i64: 1, 128>}, {pipeline_mode = #tpu.pipeline_mode<synchronous>, transform_indices = @transform_5, window_bounds = array<i64: 128, 128>}, {pipeline_mode = #tpu.pipeline_mode<synchronous>, transform_indices = @transform_6, window_bounds = array<i64: 1, 128>}, {pipeline_mode = #tpu.pipeline_mode<synchronous>, transform_indices = @transform_7, window_bounds = array<i64: 128, 128>}, {pipeline_mode = #tpu.pipeline_mode<synchronous>, transform_indices = @transform_8, window_bounds = array<i64: 1, 128>}, {pipeline_mode = #tpu.pipeline_mode<synchronous>, transform_indices = @transform_9, window_bounds = array<i64: 128, 128>}, {pipeline_mode = #tpu.pipeline_mode<synchronous>, transform_indices = @transform_10, window_bounds = array<i64: 1, 128>}, {transform_indices = @transform_11, window_bounds = array<i64: 32, 128>}]} {
    %c0 = arith.constant 0 : index
    %c0_0 = arith.constant 0 : index
    %0 = vector.load %arg2[%c0, %c0_0] : memref<1x128xf32, #tpu.memory_space<vmem>>, vector<1x128xf32>
    %c0_1 = arith.constant 0 : index
    %c0_2 = arith.constant 0 : index
    %1 = vector.load %arg3[%c0_1, %c0_2] : memref<1x128xf32, #tpu.memory_space<vmem>>, vector<1x128xf32>
    %c0_3 = arith.constant 0 : index
    %c0_4 = arith.constant 0 : index
    %2 = vector.load %arg4[%c0_3, %c0_4] : memref<128x128xbf16, #tpu.memory_space<vmem>>, vector<128x128xbf16>
    %c0_5 = arith.constant 0 : index
    %c0_6 = arith.constant 0 : index
    %3 = vector.load %arg5[%c0_5, %c0_6] : memref<1x128xf32, #tpu.memory_space<vmem>>, vector<1x128xf32>
    %c0_7 = arith.constant 0 : index
    %c0_8 = arith.constant 0 : index
    %4 = vector.load %arg1[%c0_7, %c0_8] : memref<32x128xbf16, #tpu.memory_space<vmem>>, vector<32x128xbf16>
    %cst = arith.constant dense<0.000000e+00> : vector<32x128xf32>
    %5 = tpu.matmul %4, %2, %cst {dimension_numbers = #tpu.dot_dimension_numbers<[1], [0], [0], [1], [0, 0, 1, 1], [], []>} : vector<32x128xbf16>, vector<128x128xbf16>, vector<32x128xf32> -> vector<32x128xf32>
    %6 = vector.broadcast %3 : vector<1x128xf32> to vector<32x128xf32>
    %7 = arith.addf %5, %6 : vector<32x128xf32>
    %cst_9 = arith.constant 0.000000e+00 : f32
    %8 = vector.broadcast %cst_9 : f32 to vector<32x128xf32>
    %9 = arith.maximumf %7, %8 : vector<32x128xf32>
    %10 = arith.truncf %9 : vector<32x128xf32> to vector<32x128xbf16>
    %c0_10 = arith.constant 0 : index
    %c0_11 = arith.constant 0 : index
    %11 = vector.load %arg6[%c0_10, %c0_11] : memref<128x128xbf16, #tpu.memory_space<vmem>>, vector<128x128xbf16>
    %c0_12 = arith.constant 0 : index
    %c0_13 = arith.constant 0 : index
    %12 = vector.load %arg7[%c0_12, %c0_13] : memref<1x128xf32, #tpu.memory_space<vmem>>, vector<1x128xf32>
    %cst_14 = arith.constant dense<0.000000e+00> : vector<32x128xf32>
    %13 = tpu.matmul %10, %11, %cst_14 {dimension_numbers = #tpu.dot_dimension_numbers<[1], [0], [0], [1], [0, 0, 1, 1], [], []>} : vector<32x128xbf16>, vector<128x128xbf16>, vector<32x128xf32> -> vector<32x128xf32>
    %14 = vector.broadcast %12 : vector<1x128xf32> to vector<32x128xf32>
    %15 = arith.addf %13, %14 : vector<32x128xf32>
    %cst_15 = arith.constant dense<0.000000e+00> : vector<32xf32>
    %16 = vector.multi_reduction <add>, %15, %cst_15 [1] : vector<32x128xf32> to vector<32xf32>
    %17 = vector.shape_cast %16 : vector<32xf32> to vector<32x1xf32>
    %cst_16 = arith.constant 1.280000e+02 : f32
    %18 = vector.broadcast %cst_16 : f32 to vector<32x1xf32>
    %19 = arith.divf %17, %18 : vector<32x1xf32>
    %20 = arith.mulf %15, %15 : vector<32x128xf32>
    %cst_17 = arith.constant dense<0.000000e+00> : vector<32xf32>
    %21 = vector.multi_reduction <add>, %20, %cst_17 [1] : vector<32x128xf32> to vector<32xf32>
    %22 = vector.shape_cast %21 : vector<32xf32> to vector<32x1xf32>
    %cst_18 = arith.constant 1.280000e+02 : f32
    %23 = vector.broadcast %cst_18 : f32 to vector<32x1xf32>
    %24 = arith.divf %22, %23 : vector<32x1xf32>
    %25 = arith.mulf %19, %19 : vector<32x1xf32>
    %26 = arith.subf %24, %25 : vector<32x1xf32>
    %cst_19 = arith.constant 9.99999974E-6 : f32
    %27 = vector.broadcast %cst_19 : f32 to vector<32x1xf32>
    %28 = arith.addf %26, %27 : vector<32x1xf32>
    %29 = math.rsqrt %28 : vector<32x1xf32>
    %30 = vector.broadcast %19 : vector<32x1xf32> to vector<32x128xf32>
    %31 = arith.subf %15, %30 : vector<32x128xf32>
    %32 = vector.broadcast %29 : vector<32x1xf32> to vector<32x128xf32>
    %33 = arith.mulf %31, %32 : vector<32x128xf32>
    %34 = vector.broadcast %0 : vector<1x128xf32> to vector<32x128xf32>
    %35 = arith.mulf %33, %34 : vector<32x128xf32>
    %36 = vector.broadcast %1 : vector<1x128xf32> to vector<32x128xf32>
    %37 = arith.addf %35, %36 : vector<32x128xf32>
    %cst_20 = arith.constant 0.000000e+00 : f32
    %38 = vector.broadcast %cst_20 : f32 to vector<32x128xf32>
    %39 = arith.maximumf %37, %38 : vector<32x128xf32>
    %40 = arith.truncf %39 : vector<32x128xf32> to vector<32x128xbf16>
    %c0_21 = arith.constant 0 : index
    %c0_22 = arith.constant 0 : index
    %41 = vector.load %arg8[%c0_21, %c0_22] : memref<128x128xbf16, #tpu.memory_space<vmem>>, vector<128x128xbf16>
    %c0_23 = arith.constant 0 : index
    %c0_24 = arith.constant 0 : index
    %42 = vector.load %arg9[%c0_23, %c0_24] : memref<1x128xf32, #tpu.memory_space<vmem>>, vector<1x128xf32>
    %cst_25 = arith.constant dense<0.000000e+00> : vector<32x128xf32>
    %43 = tpu.matmul %40, %41, %cst_25 {dimension_numbers = #tpu.dot_dimension_numbers<[1], [0], [0], [1], [0, 0, 1, 1], [], []>} : vector<32x128xbf16>, vector<128x128xbf16>, vector<32x128xf32> -> vector<32x128xf32>
    %44 = vector.broadcast %42 : vector<1x128xf32> to vector<32x128xf32>
    %45 = arith.addf %43, %44 : vector<32x128xf32>
    %cst_26 = arith.constant dense<0.000000e+00> : vector<32xf32>
    %46 = vector.multi_reduction <add>, %45, %cst_26 [1] : vector<32x128xf32> to vector<32xf32>
    %47 = vector.shape_cast %46 : vector<32xf32> to vector<32x1xf32>
    %cst_27 = arith.constant 1.280000e+02 : f32
    %48 = vector.broadcast %cst_27 : f32 to vector<32x1xf32>
    %49 = arith.divf %47, %48 : vector<32x1xf32>
    %50 = arith.mulf %45, %45 : vector<32x128xf32>
    %cst_28 = arith.constant dense<0.000000e+00> : vector<32xf32>
    %51 = vector.multi_reduction <add>, %50, %cst_28 [1] : vector<32x128xf32> to vector<32xf32>
    %52 = vector.shape_cast %51 : vector<32xf32> to vector<32x1xf32>
    %cst_29 = arith.constant 1.280000e+02 : f32
    %53 = vector.broadcast %cst_29 : f32 to vector<32x1xf32>
    %54 = arith.divf %52, %53 : vector<32x1xf32>
    %55 = arith.mulf %49, %49 : vector<32x1xf32>
    %56 = arith.subf %54, %55 : vector<32x1xf32>
    %cst_30 = arith.constant 9.99999974E-6 : f32
    %57 = vector.broadcast %cst_30 : f32 to vector<32x1xf32>
    %58 = arith.addf %56, %57 : vector<32x1xf32>
    %59 = math.rsqrt %58 : vector<32x1xf32>
    %60 = vector.broadcast %49 : vector<32x1xf32> to vector<32x128xf32>
    %61 = arith.subf %45, %60 : vector<32x128xf32>
    %62 = vector.broadcast %59 : vector<32x1xf32> to vector<32x128xf32>
    %63 = arith.mulf %61, %62 : vector<32x128xf32>
    %64 = vector.broadcast %0 : vector<1x128xf32> to vector<32x128xf32>
    %65 = arith.mulf %63, %64 : vector<32x128xf32>
    %66 = vector.broadcast %1 : vector<1x128xf32> to vector<32x128xf32>
    %67 = arith.addf %65, %66 : vector<32x128xf32>
    %cst_31 = arith.constant 0.000000e+00 : f32
    %68 = vector.broadcast %cst_31 : f32 to vector<32x128xf32>
    %69 = arith.maximumf %67, %68 : vector<32x128xf32>
    %70 = arith.truncf %69 : vector<32x128xf32> to vector<32x128xbf16>
    %c0_32 = arith.constant 0 : index
    %c0_33 = arith.constant 0 : index
    %71 = vector.load %arg10[%c0_32, %c0_33] : memref<128x128xbf16, #tpu.memory_space<vmem>>, vector<128x128xbf16>
    %c0_34 = arith.constant 0 : index
    %c0_35 = arith.constant 0 : index
    %72 = vector.load %arg11[%c0_34, %c0_35] : memref<1x128xf32, #tpu.memory_space<vmem>>, vector<1x128xf32>
    %cst_36 = arith.constant dense<0.000000e+00> : vector<32x128xf32>
    %73 = tpu.matmul %70, %71, %cst_36 {dimension_numbers = #tpu.dot_dimension_numbers<[1], [0], [0], [1], [0, 0, 1, 1], [], []>} : vector<32x128xbf16>, vector<128x128xbf16>, vector<32x128xf32> -> vector<32x128xf32>
    %74 = vector.broadcast %72 : vector<1x128xf32> to vector<32x128xf32>
    %75 = arith.addf %73, %74 : vector<32x128xf32>
    %c0_37 = arith.constant 0 : index
    %c0_38 = arith.constant 0 : index
    %76 = vector.load %arg12[%c0_37, %c0_38] : memref<32x128xf32, #tpu.memory_space<vmem>>, vector<32x128xf32>
    tpu.vector_store %arg12[%c0_37, %c0_38], %75 {strides = array<i32>} : memref<32x128xf32, #tpu.memory_space<vmem>>, vector<32x128xf32>,
    return
  }
  func.func @transform_0(%arg0: i32) -> (i32, i32) {
    %c0_i32 = arith.constant 0 : i32
    %c0_i32_0 = arith.constant 0 : i32
    return %arg0, %c0_i32 : i32, i32
  }
  func.func @transform_1(%arg0: i32) -> (i32, i32) {
    %c0_i32 = arith.constant 0 : i32
    %c0_i32_0 = arith.constant 0 : i32
    %c0_i32_1 = arith.constant 0 : i32
    return %c0_i32, %c0_i32_0 : i32, i32
  }
  func.func @transform_2(%arg0: i32) -> (i32, i32) {
    %c0_i32 = arith.constant 0 : i32
    %c0_i32_0 = arith.constant 0 : i32
    %c0_i32_1 = arith.constant 0 : i32
    return %c0_i32, %c0_i32_0 : i32, i32
  }
  func.func @transform_3(%arg0: i32) -> (i32, i32) {
    %c0_i32 = arith.constant 0 : i32
    %c0_i32_0 = arith.constant 0 : i32
    %c0_i32_1 = arith.constant 0 : i32
    return %c0_i32, %c0_i32_0 : i32, i32
  }
  func.func @transform_4(%arg0: i32) -> (i32, i32) {
    %c0_i32 = arith.constant 0 : i32
    %c0_i32_0 = arith.constant 0 : i32
    %c0_i32_1 = arith.constant 0 : i32
    return %c0_i32, %c0_i32_0 : i32, i32
  }
  func.func @transform_5(%arg0: i32) -> (i32, i32) {
    %c0_i32 = arith.constant 0 : i32
    %c0_i32_0 = arith.constant 0 : i32
    %c0_i32_1 = arith.constant 0 : i32
    return %c0_i32, %c0_i32_0 : i32, i32
  }
  func.func @transform_6(%arg0: i32) -> (i32, i32) {
    %c0_i32 = arith.constant 0 : i32
    %c0_i32_0 = arith.constant 0 : i32
    %c0_i32_1 = arith.constant 0 : i32
    return %c0_i32, %c0_i32_0 : i32, i32
  }
  func.func @transform_7(%arg0: i32) -> (i32, i32) {
    %c0_i32 = arith.constant 0 : i32
    %c0_i32_0 = arith.constant 0 : i32
    %c0_i32_1 = arith.constant 0 : i32
    return %c0_i32, %c0_i32_0 : i32, i32
  }
  func.func @transform_8(%arg0: i32) -> (i32, i32) {
    %c0_i32 = arith.constant 0 : i32
    %c0_i32_0 = arith.constant 0 : i32
    %c0_i32_1 = arith.constant 0 : i32
    return %c0_i32, %c0_i32_0 : i32, i32
  }
  func.func @transform_9(%arg0: i32) -> (i32, i32) {
    %c0_i32 = arith.constant 0 : i32
    %c0_i32_0 = arith.constant 0 : i32
    %c0_i32_1 = arith.constant 0 : i32
    return %c0_i32, %c0_i32_0 : i32, i32
  }
  func.func @transform_10(%arg0: i32) -> (i32, i32) {
    %c0_i32 = arith.constant 0 : i32
    %c0_i32_0 = arith.constant 0 : i32
    %c0_i32_1 = arith.constant 0 : i32
    return %c0_i32, %c0_i32_0 : i32, i32
  }
  func.func @transform_11(%arg0: i32) -> (i32, i32) {
    %c0_i32 = arith.constant 0 : i32
    %c0_i32_0 = arith.constant 0 : i32
    return %arg0, %c0_i32 : i32, i32
  }
}

module attributes {stable_mosaic.version = 11 : i64} {
  func.func @kernel(%arg0: i32, %arg1: memref<32x128xbf16, #tpu.memory_space<vmem>>, %arg2: memref<1x128xf32, #tpu.memory_space<vmem>>, %arg3: memref<1x128xf32, #tpu.memory_space<vmem>>, %arg4: memref<128x128xbf16, #tpu.memory_space<vmem>>, %arg5: memref<1x128xf32, #tpu.memory_space<vmem>>, %arg6: memref<128x128xbf16, #tpu.memory_space<vmem>>, %arg7: memref<1x128xf32, #tpu.memory_space<vmem>>, %arg8: memref<128x128xbf16, #tpu.memory_space<vmem>>, %arg9: memref<1x128xf32, #tpu.memory_space<vmem>>, %arg10: memref<128x128xbf16, #tpu.memory_space<vmem>>, %arg11: memref<1x128xf32, #tpu.memory_space<vmem>>, %arg12: memref<32x128xf32, #tpu.memory_space<vmem>>) attributes {dimension_semantics = [#tpu.dimension_semantics<parallel>], iteration_bounds = array<i64: 2>, scalar_prefetch = 0 : i64, scratch_operands = 0 : i64, tpu.core_type = #tpu.core_type<tc>, window_params = [{transform_indices = @transform_0, window_bounds = array<i64: 32, 128>}, {pipeline_mode = #tpu.pipeline_mode<synchronous>, transform_indices = @transform_1, window_bounds = array<i64: 1, 128>}, {pipeline_mode = #tpu.pipeline_mode<synchronous>, transform_indices = @transform_2, window_bounds = array<i64: 1, 128>}, {pipeline_mode = #tpu.pipeline_mode<synchronous>, transform_indices = @transform_3, window_bounds = array<i64: 128, 128>}, {pipeline_mode = #tpu.pipeline_mode<synchronous>, transform_indices = @transform_4, window_bounds = array<i64: 1, 128>}, {pipeline_mode = #tpu.pipeline_mode<synchronous>, transform_indices = @transform_5, window_bounds = array<i64: 128, 128>}, {pipeline_mode = #tpu.pipeline_mode<synchronous>, transform_indices = @transform_6, window_bounds = array<i64: 1, 128>}, {pipeline_mode = #tpu.pipeline_mode<synchronous>, transform_indices = @transform_7, window_bounds = array<i64: 128, 128>}, {pipeline_mode = #tpu.pipeline_mode<synchronous>, transform_indices = @transform_8, window_bounds = array<i64: 1, 128>}, {pipeline_mode = #tpu.pipeline_mode<synchronous>, transform_indices = @transform_9, window_bounds = array<i64: 128, 128>}, {pipeline_mode = #tpu.pipeline_mode<synchronous>, transform_indices = @transform_10, window_bounds = array<i64: 1, 128>}, {transform_indices = @transform_11, window_bounds = array<i64: 32, 128>}]} {
    %c0 = arith.constant 0 : index
    %c0_0 = arith.constant 0 : index
    %0 = vector.load %arg2[%c0, %c0_0] : memref<1x128xf32, #tpu.memory_space<vmem>>, vector<1x128xf32>
    %c0_1 = arith.constant 0 : index
    %c0_2 = arith.constant 0 : index
    %1 = vector.load %arg3[%c0_1, %c0_2] : memref<1x128xf32, #tpu.memory_space<vmem>>, vector<1x128xf32>
    %c0_3 = arith.constant 0 : index
    %c0_4 = arith.constant 0 : index
    %2 = vector.load %arg4[%c0_3, %c0_4] : memref<128x128xbf16, #tpu.memory_space<vmem>>, vector<128x128xbf16>
    %c0_5 = arith.constant 0 : index
    %c0_6 = arith.constant 0 : index
    %3 = vector.load %arg5[%c0_5, %c0_6] : memref<1x128xf32, #tpu.memory_space<vmem>>, vector<1x128xf32>
    %c0_7 = arith.constant 0 : index
    %c0_8 = arith.constant 0 : index
    %4 = vector.load %arg1[%c0_7, %c0_8] : memref<32x128xbf16, #tpu.memory_space<vmem>>, vector<32x128xbf16>
    %cst = arith.constant dense<0.000000e+00> : vector<32x128xf32>
    %5 = tpu.matmul %4, %2, %cst {dimension_numbers = #tpu.dot_dimension_numbers<[1], [0], [0], [1], [0, 0, 1, 1], [], []>} : vector<32x128xbf16>, vector<128x128xbf16>, vector<32x128xf32> -> vector<32x128xf32>
    %6 = vector.broadcast %3 : vector<1x128xf32> to vector<32x128xf32>
    %7 = arith.addf %5, %6 : vector<32x128xf32>
    %cst_9 = arith.constant 0.000000e+00 : f32
    %8 = vector.broadcast %cst_9 : f32 to vector<32x128xf32>
    %9 = arith.maximumf %7, %8 : vector<32x128xf32>
    %10 = arith.truncf %9 : vector<32x128xf32> to vector<32x128xbf16>
    %c0_10 = arith.constant 0 : index
    %c0_11 = arith.constant 0 : index
    %11 = vector.load %arg6[%c0_10, %c0_11] : memref<128x128xbf16, #tpu.memory_space<vmem>>, vector<128x128xbf16>
    %c0_12 = arith.constant 0 : index
    %c0_13 = arith.constant 0 : index
    %12 = vector.load %arg7[%c0_12, %c0_13] : memref<1x128xf32, #tpu.memory_space<vmem>>, vector<1x128xf32>
    %cst_14 = arith.constant dense<0.000000e+00> : vector<32x128xf32>
    %13 = tpu.matmul %10, %11, %cst_14 {dimension_numbers = #tpu.dot_dimension_numbers<[1], [0], [0], [1], [0, 0, 1, 1], [], []>} : vector<32x128xbf16>, vector<128x128xbf16>, vector<32x128xf32> -> vector<32x128xf32>
    %14 = vector.broadcast %12 : vector<1x128xf32> to vector<32x128xf32>
    %15 = arith.addf %13, %14 : vector<32x128xf32>
    %cst_15 = arith.constant dense<0.000000e+00> : vector<32xf32>
    %16 = vector.multi_reduction <add>, %15, %cst_15 [1] : vector<32x128xf32> to vector<32xf32>
    %17 = vector.shape_cast %16 : vector<32xf32> to vector<32x1xf32>
    %cst_16 = arith.constant 1.280000e+02 : f32
    %18 = vector.broadcast %cst_16 : f32 to vector<32x1xf32>
    %19 = arith.divf %17, %18 : vector<32x1xf32>
    %20 = arith.mulf %15, %15 : vector<32x128xf32>
    %cst_17 = arith.constant dense<0.000000e+00> : vector<32xf32>
    %21 = vector.multi_reduction <add>, %20, %cst_17 [1] : vector<32x128xf32> to vector<32xf32>
    %22 = vector.shape_cast %21 : vector<32xf32> to vector<32x1xf32>
    %cst_18 = arith.constant 1.280000e+02 : f32
    %23 = vector.broadcast %cst_18 : f32 to vector<32x1xf32>
    %24 = arith.divf %22, %23 : vector<32x1xf32>
    %25 = arith.mulf %19, %19 : vector<32x1xf32>
    %26 = arith.subf %24, %25 : vector<32x1xf32>
    %cst_19 = arith.constant 9.99999974E-6 : f32
    %27 = vector.broadcast %cst_19 : f32 to vector<32x1xf32>
    %28 = arith.addf %26, %27 : vector<32x1xf32>
    %29 = math.rsqrt %28 : vector<32x1xf32>
    %30 = vector.broadcast %19 : vector<32x1xf32> to vector<32x128xf32>
    %31 = arith.subf %15, %30 : vector<32x128xf32>
    %32 = vector.broadcast %29 : vector<32x1xf32> to vector<32x128xf32>
    %33 = arith.mulf %31, %32 : vector<32x128xf32>
    %34 = vector.broadcast %0 : vector<1x128xf32> to vector<32x128xf32>
    %35 = arith.mulf %33, %34 : vector<32x128xf32>
    %36 = vector.broadcast %1 : vector<1x128xf32> to vector<32x128xf32>
    %37 = arith.addf %35, %36 : vector<32x128xf32>
    %cst_20 = arith.constant 0.000000e+00 : f32
    %38 = vector.broadcast %cst_20 : f32 to vector<32x128xf32>
    %39 = arith.maximumf %37, %38 : vector<32x128xf32>
    %40 = arith.truncf %39 : vector<32x128xf32> to vector<32x128xbf16>
    %c0_21 = arith.constant 0 : index
    %c0_22 = arith.constant 0 : index
    %41 = vector.load %arg8[%c0_21, %c0_22] : memref<128x128xbf16, #tpu.memory_space<vmem>>, vector<128x128xbf16>
    %c0_23 = arith.constant 0 : index
    %c0_24 = arith.constant 0 : index
    %42 = vector.load %arg9[%c0_23, %c0_24] : memref<1x128xf32, #tpu.memory_space<vmem>>, vector<1x128xf32>
    %cst_25 = arith.constant dense<0.000000e+00> : vector<32x128xf32>
    %43 = tpu.matmul %40, %41, %cst_25 {dimension_numbers = #tpu.dot_dimension_numbers<[1], [0], [0], [1], [0, 0, 1, 1], [], []>} : vector<32x128xbf16>, vector<128x128xbf16>, vector<32x128xf32> -> vector<32x128xf32>
    %44 = vector.broadcast %42 : vector<1x128xf32> to vector<32x128xf32>
    %45 = arith.addf %43, %44 : vector<32x128xf32>
    %cst_26 = arith.constant dense<0.000000e+00> : vector<32xf32>
    %46 = vector.multi_reduction <add>, %45, %cst_26 [1] : vector<32x128xf32> to vector<32xf32>
    %47 = vector.shape_cast %46 : vector<32xf32> to vector<32x1xf32>
    %cst_27 = arith.constant 1.280000e+02 : f32
    %48 = vector.broadcast %cst_27 : f32 to vector<32x1xf32>
    %49 = arith.divf %47, %48 : vector<32x1xf32>
    %50 = arith.mulf %45, %45 : vector<32x128xf32>
    %cst_28 = arith.constant dense<0.000000e+00> : vector<32xf32>
    %51 = vector.multi_reduction <add>, %50, %cst_28 [1] : vector<32x128xf32> to vector<32xf32>
    %52 = vector.shape_cast %51 : vector<32xf32> to vector<32x1xf32>
    %cst_29 = arith.constant 1.280000e+02 : f32
    %53 = vector.broadcast %cst_29 : f32 to vector<32x1xf32>
    %54 = arith.divf %52, %53 : vector<32x1xf32>
    %55 = arith.mulf %49, %49 : vector<32x1xf32>
    %56 = arith.subf %54, %55 : vector<32x1xf32>
    %cst_30 = arith.constant 9.99999974E-6 : f32
    %57 = vector.broadcast %cst_30 : f32 to vector<32x1xf32>
    %58 = arith.addf %56, %57 : vector<32x1xf32>
    %59 = math.rsqrt %58 : vector<32x1xf32>
    %60 = vector.broadcast %49 : vector<32x1xf32> to vector<32x128xf32>
    %61 = arith.subf %45, %60 : vector<32x128xf32>
    %62 = vector.broadcast %59 : vector<32x1xf32> to vector<32x128xf32>
    %63 = arith.mulf %61, %62 : vector<32x128xf32>
    %64 = vector.broadcast %0 : vector<1x128xf32> to vector<32x128xf32>
    %65 = arith.mulf %63, %64 : vector<32x128xf32>
    %66 = vector.broadcast %1 : vector<1x128xf32> to vector<32x128xf32>
    %67 = arith.addf %65, %66 : vector<32x128xf32>
    %cst_31 = arith.constant 0.000000e+00 : f32
    %68 = vector.broadcast %cst_31 : f32 to vector<32x128xf32>
    %69 = arith.maximumf %67, %68 : vector<32x128xf32>
    %70 = arith.truncf %69 : vector<32x128xf32> to vector<32x128xbf16>
    %c0_32 = arith.constant 0 : index
    %c0_33 = arith.constant 0 : index
    %71 = vector.load %arg10[%c0_32, %c0_33] : memref<128x128xbf16, #tpu.memory_space<vmem>>, vector<128x128xbf16>
    %c0_34 = arith.constant 0 : index
    %c0_35 = arith.constant 0 : index
    %72 = vector.load %arg11[%c0_34, %c0_35] : memref<1x128xf32, #tpu.memory_space<vmem>>, vector<1x128xf32>
    %cst_36 = arith.constant dense<0.000000e+00> : vector<32x128xf32>
    %73 = tpu.matmul %70, %71, %cst_36 {dimension_numbers = #tpu.dot_dimension_numbers<[1], [0], [0], [1], [0, 0, 1, 1], [], []>} : vector<32x128xbf16>, vector<128x128xbf16>, vector<32x128xf32> -> vector<32x128xf32>
    %74 = vector.broadcast %72 : vector<1x128xf32> to vector<32x128xf32>
    %75 = arith.addf %73, %74 : vector<32x128xf32>
    %c0_37 = arith.constant 0 : index
    %c0_38 = arith.constant 0 : index
    %76 = vector.load %arg12[%c0_37, %c0_38] : memref<32x128xf32, #tpu.memory_space<vmem>>, vector<32x128xf32>
    tpu.vector_store %arg12[%c0_37, %c0_38], %75 {strides = array<i32>} : memref<32x128xf32, #tpu.memory_space<vmem>>, vector<32x128xf32>,
    return
  }
  func.func @transform_0(%arg0: i32) -> (i32, i32) {
    %c0_i32 = arith.constant 0 : i32
    %c0_i32_0 = arith.constant 0 : i32
    return %arg0, %c0_i32 : i32, i32
  }
  func.func @transform_1(%arg0: i32) -> (i32, i32) {
    %c0_i32 = arith.constant 0 : i32
    %c0_i32_0 = arith.constant 0 : i32
    %c0_i32_1 = arith.constant 0 : i32
    return %c0_i32, %c0_i32_0 : i32, i32
  }
  func.func @transform_2(%arg0: i32) -> (i32, i32) {
    %c0_i32 = arith.constant 0 : i32
    %c0_i32_0 = arith.constant 0 : i32
    %c0_i32_1 = arith.constant 0 : i32
    return %c0_i32, %c0_i32_0 : i32, i32
  }
  func.func @transform_3(%arg0: i32) -> (i32, i32) {
    %c0_i32 = arith.constant 0 : i32
    %c0_i32_0 = arith.constant 0 : i32
    %c0_i32_1 = arith.constant 0 : i32
    return %c0_i32, %c0_i32_0 : i32, i32
  }
  func.func @transform_4(%arg0: i32) -> (i32, i32) {
    %c0_i32 = arith.constant 0 : i32
    %c0_i32_0 = arith.constant 0 : i32
    %c0_i32_1 = arith.constant 0 : i32
    return %c0_i32, %c0_i32_0 : i32, i32
  }
  func.func @transform_5(%arg0: i32) -> (i32, i32) {
    %c0_i32 = arith.constant 0 : i32
    %c0_i32_0 = arith.constant 0 : i32
    %c0_i32_1 = arith.constant 0 : i32
    return %c0_i32, %c0_i32_0 : i32, i32
  }
  func.func @transform_6(%arg0: i32) -> (i32, i32) {
    %c0_i32 = arith.constant 0 : i32
    %c0_i32_0 = arith.constant 0 : i32
    %c0_i32_1 = arith.constant 0 : i32
    return %c0_i32, %c0_i32_0 : i32, i32
  }
  func.func @transform_7(%arg0: i32) -> (i32, i32) {
    %c0_i32 = arith.constant 0 : i32
    %c0_i32_0 = arith.constant 0 : i32
    %c0_i32_1 = arith.constant 0 : i32
    return %c0_i32, %c0_i32_0 : i32, i32
  }
  func.func @transform_8(%arg0: i32) -> (i32, i32) {
    %c0_i32 = arith.constant 0 : i32
    %c0_i32_0 = arith.constant 0 : i32
    %c0_i32_1 = arith.constant 0 : i32
    return %c0_i32, %c0_i32_0 : i32, i32
  }
  func.func @transform_9(%arg0: i32) -> (i32, i32) {
    %c0_i32 = arith.constant 0 : i32
    %c0_i32_0 = arith.constant 0 : i32
    %c0_i32_1 = arith.constant 0 : i32
    return %c0_i32, %c0_i32_0 : i32, i32
  }
  func.func @transform_10(%arg0: i32) -> (i32, i32) {
    %c0_i32 = arith.constant 0 : i32
    %c0_i32_0 = arith.constant 0 : i32
    %c0_i32_1 = arith.constant 0 : i32
    return %c0_i32, %c0_i32_0 : i32, i32
  }
  func.func @transform_11(%arg0: i32) -> (i32, i32) {
    %c0_i32 = arith.constant 0 : i32
    %c0_i32_0 = arith.constant 0 : i32
    return %arg0, %c0_i32 : i32, i32
  }
}

</mosaic_0001>

<llo_original>
// kernel: tpu_custom_call.1
$region0: #{tpu_custom_call.1}
  #allocation0 [shape = 'u32[]', space=smem, size = 0x4, offset = 0x4, fixed_abs, tag = 'smem constant byte address 0x4 - core index']
  #allocation1 [shape = 'u32[72,128]{1,0:T(1,128)}', space=vmem, size = 0x9000, scoped, tag = 'internal scratch']
  %s0 = inlined_call_operand.hbm [shape: bf16[64,128], index: 0, kind: input, shape index: {}]
  %s1 = inlined_call_operand.hbm [shape: f32[1,128], index: 1, kind: input, shape index: {}]
  %s2 = inlined_call_operand.vmem [shape: f32[1,128], index: 2, kind: input, shape index: {}]
  %s3 = inlined_call_operand.hbm [shape: bf16[128,128], index: 3, kind: input, shape index: {}]
  %s4 = inlined_call_operand.vmem [shape: f32[1,128], index: 4, kind: input, shape index: {}]
  %s5 = inlined_call_operand.hbm [shape: bf16[128,128], index: 5, kind: input, shape index: {}]
  %s6 = inlined_call_operand.vmem [shape: f32[1,128], index: 6, kind: input, shape index: {}]
  %s7 = inlined_call_operand.hbm [shape: bf16[128,128], index: 7, kind: input, shape index: {}]
  %s8 = inlined_call_operand.vmem [shape: f32[1,128], index: 8, kind: input, shape index: {}]
  %s9 = inlined_call_operand.hbm [shape: bf16[128,128], index: 9, kind: input, shape index: {}]
  %s10 = inlined_call_operand.vmem [shape: f32[1,128], index: 10, kind: input, shape index: {}]
  %s11 = inlined_call_operand.hbm [shape: f32[64,128], index: 11, kind: output, shape index: {}]
  %s12 = sld [smem:[#allocation0]]
  $region101: #{tpu_custom_call.1} parent=0
    _
  %s14 = ssub.s32 1, %s12
  %s15 = scalar_select 0, %s14, %s12
  $region1: #{tpu_custom_call.1} parent=0
    #allocation2 [shape = 'u8[16384]{0}', space=vmem, size = 0x4000, scoped, tag = 'input window, operand 0']
    #allocation3 [shape = 's32[2]{0}', space=sflag, size = 0x8, scoped, tag = 'scoped memory for tpu_custom_call.1']
    #allocation4 [shape = 's32[2]{0}', space=sflag, size = 0x8, scoped, tag = 'scoped memory for tpu_custom_call.1']
    #allocation5 [shape = 'u8[512]{0}', space=vmem, size = 0x400, scoped, tag = 'input window, operand 1, single buffered']
    #allocation6 [shape = 's32[1]{0}', space=sflag, size = 0x4, scoped, tag = 'scoped memory for tpu_custom_call.1']
    #allocation7 [shape = 'u8[32768]{0}', space=vmem, size = 0x8000, scoped, tag = 'input window, operand 3, single buffered']
    #allocation8 [shape = 'u8[32768]{0}', space=vmem, size = 0x8000, scoped, tag = 'input window, operand 5, single buffered']
    #allocation9 [shape = 's32[1]{0}', space=sflag, size = 0x4, scoped, tag = 'scoped memory for tpu_custom_call.1']
    #allocation10 [shape = 'u8[32768]{0}', space=vmem, size = 0x8000, scoped, tag = 'input window, operand 7, single buffered']
    #allocation11 [shape = 'u8[32768]{0}', space=vmem, size = 0x8000, scoped, tag = 'input window, operand 9, single buffered']
    #allocation12 [shape = 's32[1]{0}', space=sflag, size = 0x4, scoped, tag = 'scoped memory for tpu_custom_call.1']
    #allocation13 [shape = 'u8[32768]{0}', space=vmem, size = 0x8000, scoped, tag = 'output window, operand 0']
    %16 = vsyncpa [#allocation3], 0
    %s17 = scalar_lea.sflag [#allocation3], 1
    %18 = vsyncpa %s17, 0
    %19 = vsyncpa [#allocation6], 0
    %20 = vsyncpa [#allocation9], 0
    %21 = vsyncpa [#allocation12], 0
    %22 = vsyncpa [#allocation4], 0
    %s23 = scalar_lea.sflag [#allocation4], 1
    %24 = vsyncpa %s23, 0
    loop: start=0, step=1, limit=4
    $region2: #{tpu_custom_call.1} parent=1 // loop_pre_header
      _
    $region3: #{tpu_custom_call.1} parent=1 // loop_header
      %s26 = sphi 0, %s30
      %p27 = scmp.ge.s32.totalorder %s26, 4
      %s36 = sphi 0, %s38
      %s39 = sphi 0, %s36
      %s40 = sphi 0, %s39
      %s56 = sphi 0, %s40
      %s60 = sphi 0, %s60
      %s62 = sphi 0, %s60
      %s63 = sphi 0, %s62
      %s77 = sphi 0, %s63
      %s81 = sphi 0, %s81
      %s83 = sphi 0, %s81
      %s84 = sphi 0, %s83
      %s98 = sphi 0, %s84
      %s102 = sphi 0, %s102
      %s104 = sphi 0, %s102
      %s105 = sphi 0, %s104
      %s119 = sphi 0, %s105
      %s123 = sphi 0, %s123
      %s125 = sphi 0, %s123
      %s126 = sphi 0, %s125
      %s140 = sphi 0, %s126
      %s144 = sphi 0, %s144
      %s146 = sphi 0, %s144
      %s147 = sphi 0, %s146
      %s161 = sphi 0, %s147
      %s165 = sphi 0, %s165
      %s167 = sphi 0, %s165
      %s168 = sphi 0, %s167
      %s182 = sphi 0, %s168
      %s186 = sphi 0, %s186
      %s188 = sphi 0, %s186
      %s189 = sphi 0, %s188
      %s203 = sphi 0, %s189
      %s207 = sphi 0, %s207
      %s209 = sphi 0, %s207
      %s210 = sphi 0, %s209
      %s224 = sphi 0, %s210
      %s228 = sphi 0, %s228
      %s230 = sphi 0, %s228
      %s231 = sphi 0, %s230
      %s245 = sphi 0, %s231
      %s249 = sphi 0, %s249
      %s251 = sphi 0, %s249
      %s252 = sphi 0, %s251
      %s266 = sphi 0, %s252
      %s272 = sphi 0, %s274
      %s275 = sphi 0, %s272
      %s276 = sphi 0, %s275
      %s292 = sphi 0, %s276
    $region4: #{tpu_custom_call.1} parent=1 // loop_header_branch
      %29 = sbr.rel (%p27) target = $region8
    $region5: #{tpu_custom_call.1} parent=1 // loop_body
      %s31 = ssub.s32 %s26, 1
      %s32 = ssub.s32 %s26, 2
      %s33 = sadd.s32 %s26, 1
      %s34 = ssub.s32 %s26, %s33
      %p35 = scmp.eq.s32.totalorder %s34, 0
      %s37 = sadd.s32 %s36, 1
      %s38 = scalar_select %p35, %s36, %s37
      %p41 = pneg %p35
      %p42 = scmp.eq.s32.totalorder %s26, 1
      %p43 = por %p41, %p42
      %p44 = scmp.ne.s32.totalorder %s36, %s39
      %p45 = scmp.eq.s32.totalorder %s26, 0
      %p46 = por %p44, %p45
      %p47 = scmp.ne.s32.totalorder %s36, %s39
      %p48 = scmp.eq.s32.totalorder %s31, 1
      %p49 = por %p47, %p48
      %p50 = scmp.ne.s32.totalorder %s39, %s40
      %p51 = scmp.eq.s32.totalorder %s31, 0
      %p52 = por %p50, %p51
      %p53 = scmp.ne.s32.totalorder %s39, %s40
      %p54 = scmp.eq.s32.totalorder %s32, 1
      %p55 = por %p53, %p54
      %p57 = scmp.ne.s32.totalorder %s40, %s56
      %p58 = scmp.eq.s32.totalorder %s32, 0
      %p59 = por %p57, %p58
      %s61 = sadd.s32 %s60, 1
      %p64 = scmp.eq.s32.totalorder %s26, 1
      %p65 = scmp.ne.s32.totalorder %s60, %s62
      %p66 = scmp.eq.s32.totalorder %s26, 0
      %p67 = por %p65, %p66
      %p68 = scmp.ne.s32.totalorder %s60, %s62
      %p69 = scmp.eq.s32.totalorder %s31, 1
      %p70 = por %p68, %p69
      %p71 = scmp.ne.s32.totalorder %s62, %s63
      %p72 = scmp.eq.s32.totalorder %s31, 0
      %p73 = por %p71, %p72
      %p74 = scmp.ne.s32.totalorder %s62, %s63
      %p75 = scmp.eq.s32.totalorder %s32, 1
      %p76 = por %p74, %p75
      %p78 = scmp.ne.s32.totalorder %s63, %s77
      %p79 = scmp.eq.s32.totalorder %s32, 0
      %p80 = por %p78, %p79
      %s82 = sadd.s32 %s81, 1
      %p85 = scmp.eq.s32.totalorder %s26, 1
      %p86 = scmp.ne.s32.totalorder %s81, %s83
      %p87 = scmp.eq.s32.totalorder %s26, 0
      %p88 = por %p86, %p87
      %p89 = scmp.ne.s32.totalorder %s81, %s83
      %p90 = scmp.eq.s32.totalorder %s31, 1
      %p91 = por %p89, %p90
      %p92 = scmp.ne.s32.totalorder %s83, %s84
      %p93 = scmp.eq.s32.totalorder %s31, 0
      %p94 = por %p92, %p93
      %p95 = scmp.ne.s32.totalorder %s83, %s84
      %p96 = scmp.eq.s32.totalorder %s32, 1
      %p97 = por %p95, %p96
      %p99 = scmp.ne.s32.totalorder %s84, %s98
      %p100 = scmp.eq.s32.totalorder %s32, 0
      %p101 = por %p99, %p100
      %s103 = sadd.s32 %s102, 1
      %p106 = scmp.eq.s32.totalorder %s26, 1
      %p107 = scmp.ne.s32.totalorder %s102, %s104
      %p108 = scmp.eq.s32.totalorder %s26, 0
      %p109 = por %p107, %p108
      %p110 = scmp.ne.s32.totalorder %s102, %s104
      %p111 = scmp.eq.s32.totalorder %s31, 1
      %p112 = por %p110, %p111
      %p113 = scmp.ne.s32.totalorder %s104, %s105
      %p114 = scmp.eq.s32.totalorder %s31, 0
      %p115 = por %p113, %p114
      %p116 = scmp.ne.s32.totalorder %s104, %s105
      %p117 = scmp.eq.s32.totalorder %s32, 1
      %p118 = por %p116, %p117
      %p120 = scmp.ne.s32.totalorder %s105, %s119
      %p121 = scmp.eq.s32.totalorder %s32, 0
      %p122 = por %p120, %p121
      %s124 = sadd.s32 %s123, 1
      %p127 = scmp.eq.s32.totalorder %s26, 1
      %p128 = scmp.ne.s32.totalorder %s123, %s125
      %p129 = scmp.eq.s32.totalorder %s26, 0
      %p130 = por %p128, %p129
      %p131 = scmp.ne.s32.totalorder %s123, %s125
      %p132 = scmp.eq.s32.totalorder %s31, 1
      %p133 = por %p131, %p132
      %p134 = scmp.ne.s32.totalorder %s125, %s126
      %p135 = scmp.eq.s32.totalorder %s31, 0
      %p136 = por %p134, %p135
      %p137 = scmp.ne.s32.totalorder %s125, %s126
      %p138 = scmp.eq.s32.totalorder %s32, 1
      %p139 = por %p137, %p138
      %p141 = scmp.ne.s32.totalorder %s126, %s140
      %p142 = scmp.eq.s32.totalorder %s32, 0
      %p143 = por %p141, %p142
      %s145 = sadd.s32 %s144, 1
      %p148 = scmp.eq.s32.totalorder %s26, 1
      %p149 = scmp.ne.s32.totalorder %s144, %s146
      %p150 = scmp.eq.s32.totalorder %s26, 0
      %p151 = por %p149, %p150
      %p152 = scmp.ne.s32.totalorder %s144, %s146
      %p153 = scmp.eq.s32.totalorder %s31, 1
      %p154 = por %p152, %p153
      %p155 = scmp.ne.s32.totalorder %s146, %s147
      %p156 = scmp.eq.s32.totalorder %s31, 0
      %p157 = por %p155, %p156
      %p158 = scmp.ne.s32.totalorder %s146, %s147
      %p159 = scmp.eq.s32.totalorder %s32, 1
      %p160 = por %p158, %p159
      %p162 = scmp.ne.s32.totalorder %s147, %s161
      %p163 = scmp.eq.s32.totalorder %s32, 0
      %p164 = por %p162, %p163
      %s166 = sadd.s32 %s165, 1
      %p169 = scmp.eq.s32.totalorder %s26, 1
      %p170 = scmp.ne.s32.totalorder %s165, %s167
      %p171 = scmp.eq.s32.totalorder %s26, 0
      %p172 = por %p170, %p171
      %p173 = scmp.ne.s32.totalorder %s165, %s167
      %p174 = scmp.eq.s32.totalorder %s31, 1
      %p175 = por %p173, %p174
      %p176 = scmp.ne.s32.totalorder %s167, %s168
      %p177 = scmp.eq.s32.totalorder %s31, 0
      %p178 = por %p176, %p177
      %p179 = scmp.ne.s32.totalorder %s167, %s168
      %p180 = scmp.eq.s32.totalorder %s32, 1
      %p181 = por %p179, %p180
      %p183 = scmp.ne.s32.totalorder %s168, %s182
      %p184 = scmp.eq.s32.totalorder %s32, 0
      %p185 = por %p183, %p184
      %s187 = sadd.s32 %s186, 1
      %p190 = scmp.eq.s32.totalorder %s26, 1
      %p191 = scmp.ne.s32.totalorder %s186, %s188
      %p192 = scmp.eq.s32.totalorder %s26, 0
      %p193 = por %p191, %p192
      %p194 = scmp.ne.s32.totalorder %s186, %s188
      %p195 = scmp.eq.s32.totalorder %s31, 1
      %p196 = por %p194, %p195
      %p197 = scmp.ne.s32.totalorder %s188, %s189
      %p198 = scmp.eq.s32.totalorder %s31, 0
      %p199 = por %p197, %p198
      %p200 = scmp.ne.s32.totalorder %s188, %s189
      %p201 = scmp.eq.s32.totalorder %s32, 1
      %p202 = por %p200, %p201
      %p204 = scmp.ne.s32.totalorder %s189, %s203
      %p205 = scmp.eq.s32.totalorder %s32, 0
      %p206 = por %p204, %p205
      %s208 = sadd.s32 %s207, 1
      %p211 = scmp.eq.s32.totalorder %s26, 1
      %p212 = scmp.ne.s32.totalorder %s207, %s209
      %p213 = scmp.eq.s32.totalorder %s26, 0
      %p214 = por %p212, %p213
      %p215 = scmp.ne.s32.totalorder %s207, %s209
      %p216 = scmp.eq.s32.totalorder %s31, 1
      %p217 = por %p215, %p216
      %p218 = scmp.ne.s32.totalorder %s209, %s210
      %p219 = scmp.eq.s32.totalorder %s31, 0
      %p220 = por %p218, %p219
      %p221 = scmp.ne.s32.totalorder %s209, %s210
      %p222 = scmp.eq.s32.totalorder %s32, 1
      %p223 = por %p221, %p222
      %p225 = scmp.ne.s32.totalorder %s210, %s224
      %p226 = scmp.eq.s32.totalorder %s32, 0
      %p227 = por %p225, %p226
      %s229 = sadd.s32 %s228, 1
      %p232 = scmp.eq.s32.totalorder %s26, 1
      %p233 = scmp.ne.s32.totalorder %s228, %s230
      %p234 = scmp.eq.s32.totalorder %s26, 0
      %p235 = por %p233, %p234
      %p236 = scmp.ne.s32.totalorder %s228, %s230
      %p237 = scmp.eq.s32.totalorder %s31, 1
      %p238 = por %p236, %p237
      %p239 = scmp.ne.s32.totalorder %s230, %s231
      %p240 = scmp.eq.s32.totalorder %s31, 0
      %p241 = por %p239, %p240
      %p242 = scmp.ne.s32.totalorder %s230, %s231
      %p243 = scmp.eq.s32.totalorder %s32, 1
      %p244 = por %p242, %p243
      %p246 = scmp.ne.s32.totalorder %s231, %s245
      %p247 = scmp.eq.s32.totalorder %s32, 0
      %p248 = por %p246, %p247
      %s250 = sadd.s32 %s249, 1
      %p253 = scmp.eq.s32.totalorder %s26, 1
      %p254 = scmp.ne.s32.totalorder %s249, %s251
      %p255 = scmp.eq.s32.totalorder %s26, 0
      %p256 = por %p254, %p255
      %p257 = scmp.ne.s32.totalorder %s249, %s251
      %p258 = scmp.eq.s32.totalorder %s31, 1
      %p259 = por %p257, %p258
      %p260 = scmp.ne.s32.totalorder %s251, %s252
      %p261 = scmp.eq.s32.totalorder %s31, 0
      %p262 = por %p260, %p261
      %p263 = scmp.ne.s32.totalorder %s251, %s252
      %p264 = scmp.eq.s32.totalorder %s32, 1
      %p265 = por %p263, %p264
      %p267 = scmp.ne.s32.totalorder %s252, %s266
      %p268 = scmp.eq.s32.totalorder %s32, 0
      %p269 = por %p267, %p268
      %s270 = ssub.s32 %s26, %s33
      %p271 = scmp.eq.s32.totalorder %s270, 0
      %s273 = sadd.s32 %s272, 1
      %s274 = scalar_select %p271, %s272, %s273
      %p277 = pneg %p271
      %p278 = scmp.eq.s32.totalorder %s26, 1
      %p279 = por %p277, %p278
      %p280 = scmp.ne.s32.totalorder %s272, %s275
      %p281 = scmp.eq.s32.totalorder %s26, 0
      %p282 = por %p280, %p281
      %p283 = scmp.ne.s32.totalorder %s272, %s275
      %p284 = scmp.eq.s32.totalorder %s31, 1
      %p285 = por %p283, %p284
      %p286 = scmp.ne.s32.totalorder %s275, %s276
      %p287 = scmp.eq.s32.totalorder %s31, 0
      %p288 = por %p286, %p287
      %p289 = scmp.ne.s32.totalorder %s275, %s276
      %p290 = scmp.eq.s32.totalorder %s32, 1
      %p291 = por %p289, %p290
      %p293 = scmp.ne.s32.totalorder %s276, %s292
      %p294 = scmp.eq.s32.totalorder %s32, 0
      %p295 = por %p293, %p294
      %p296 = scmp.le.s32.totalorder 1, %s26
      %p297 = scmp.lt.s32.totalorder %s26, 3
      %p298 = pnand %p296, %p297
      %p299 = pneg %p298
      // Predicated region
      $region9: #{tpu_custom_call.1} parent=5 // pred_check
        _
      $region10: #{tpu_custom_call.1} parent=5 // pred_check_branch
        %301 = sbr.rel (%p298) target = $region12
      $region11: #{tpu_custom_call.1} parent=5 // pred_region
        %s302 = ssub.s32 %s26, 1
        // Predicated region
        $region13: #{tpu_custom_call.1} parent=11 // pred_check
          %p303 = pneg %p73
        $region14: #{tpu_custom_call.1} parent=11 // pred_check_branch
          %305 = sbr.rel (%p303) target = $region16
        $region15: #{tpu_custom_call.1} parent=11 // pred_region
          %307 = vsyncadd [#allocation6], 0
          %s309 = sshll.u32 %s1, 4
          %s310 = int_to_ptr.hbm [resolvable:$true] %s309
          %s311 = sshll.u32 [#allocation5], 4
          %s312 = int_to_ptr.vmem [resolvable:$true] %s311
          %314 = dma.hbm_to_vmem [thread:$0]  %s310, 16, %s312, [#allocation6]
        $region16: #{tpu_custom_call.1} parent=11 // pred_fallthru
          _
        // Predicated region
        $region17: #{tpu_custom_call.1} parent=11 // pred_check
          %p315 = pneg %p94
        $region18: #{tpu_custom_call.1} parent=11 // pred_check_branch
          %317 = sbr.rel (%p315) target = $region20
        $region19: #{tpu_custom_call.1} parent=11 // pred_region
          _
        $region20: #{tpu_custom_call.1} parent=11 // pred_fallthru
          _
        // Predicated region
        $region21: #{tpu_custom_call.1} parent=11 // pred_check
          %p318 = pneg %p115
        $region22: #{tpu_custom_call.1} parent=11 // pred_check_branch
          %320 = sbr.rel (%p318) target = $region24
        $region23: #{tpu_custom_call.1} parent=11 // pred_region
          %322 = vsyncadd [#allocation6], 0
          %s323 = sshll.u32 %s3, 4
          %s324 = int_to_ptr.hbm [resolvable:$true] %s323
          %s325 = sshll.u32 [#allocation7], 4
          %s326 = int_to_ptr.vmem [resolvable:$true] %s325
          %331 = dma.hbm_to_vmem [thread:$0]  %s324, 1024, %s326, [#allocation6], 64, 64, 4
        $region24: #{tpu_custom_call.1} parent=11 // pred_fallthru
          _
        // Predicated region
        $region25: #{tpu_custom_call.1} parent=11 // pred_check
          %p332 = pneg %p136
        $region26: #{tpu_custom_call.1} parent=11 // pred_check_branch
          %334 = sbr.rel (%p332) target = $region28
        $region27: #{tpu_custom_call.1} parent=11 // pred_region
          _
        $region28: #{tpu_custom_call.1} parent=11 // pred_fallthru
          _
        // Predicated region
        $region29: #{tpu_custom_call.1} parent=11 // pred_check
          %p335 = pneg %p157
        $region30: #{tpu_custom_call.1} parent=11 // pred_check_branch
          %337 = sbr.rel (%p335) target = $region32
        $region31: #{tpu_custom_call.1} parent=11 // pred_region
          %339 = vsyncadd [#allocation9], 0
          %s340 = sshll.u32 %s5, 4
          %s341 = int_to_ptr.hbm [resolvable:$true] %s340
          %s342 = sshll.u32 [#allocation8], 4
          %s343 = int_to_ptr.vmem [resolvable:$true] %s342
          %348 = dma.hbm_to_vmem [thread:$0]  %s341, 1024, %s343, [#allocation9], 64, 64, 4
        $region32: #{tpu_custom_call.1} parent=11 // pred_fallthru
          _
        // Predicated region
        $region33: #{tpu_custom_call.1} parent=11 // pred_check
          %p349 = pneg %p178
        $region34: #{tpu_custom_call.1} parent=11 // pred_check_branch
          %351 = sbr.rel (%p349) target = $region36
        $region35: #{tpu_custom_call.1} parent=11 // pred_region
          _
        $region36: #{tpu_custom_call.1} parent=11 // pred_fallthru
          _
        // Predicated region
        $region37: #{tpu_custom_call.1} parent=11 // pred_check
          %p352 = pneg %p199
        $region38: #{tpu_custom_call.1} parent=11 // pred_check_branch
          %354 = sbr.rel (%p352) target = $region40
        $region39: #{tpu_custom_call.1} parent=11 // pred_region
          %356 = vsyncadd [#allocation9], 0
          %s357 = sshll.u32 %s7, 4
          %s358 = int_to_ptr.hbm [resolvable:$true] %s357
          %s359 = sshll.u32 [#allocation10], 4
          %s360 = int_to_ptr.vmem [resolvable:$true] %s359
          %365 = dma.hbm_to_vmem [thread:$0]  %s358, 1024, %s360, [#allocation9], 64, 64, 4
        $region40: #{tpu_custom_call.1} parent=11 // pred_fallthru
          _
        // Predicated region
        $region41: #{tpu_custom_call.1} parent=11 // pred_check
          %p366 = pneg %p220
        $region42: #{tpu_custom_call.1} parent=11 // pred_check_branch
          %368 = sbr.rel (%p366) target = $region44
        $region43: #{tpu_custom_call.1} parent=11 // pred_region
          _
        $region44: #{tpu_custom_call.1} parent=11 // pred_fallthru
          _
        // Predicated region
        $region45: #{tpu_custom_call.1} parent=11 // pred_check
          %p369 = pneg %p241
        $region46: #{tpu_custom_call.1} parent=11 // pred_check_branch
          %371 = sbr.rel (%p369) target = $region48
        $region47: #{tpu_custom_call.1} parent=11 // pred_region
          %373 = vsyncadd [#allocation12], 0
          %s374 = sshll.u32 %s9, 4
          %s375 = int_to_ptr.hbm [resolvable:$true] %s374
          %s376 = sshll.u32 [#allocation11], 4
          %s377 = int_to_ptr.vmem [resolvable:$true] %s376
          %382 = dma.hbm_to_vmem [thread:$0]  %s375, 1024, %s377, [#allocation12], 64, 64, 4
        $region48: #{tpu_custom_call.1} parent=11 // pred_fallthru
          _
        // Predicated region
        $region49: #{tpu_custom_call.1} parent=11 // pred_check
          %p383 = pneg %p262
        $region50: #{tpu_custom_call.1} parent=11 // pred_check_branch
          %385 = sbr.rel (%p383) target = $region52
        $region51: #{tpu_custom_call.1} parent=11 // pred_region
          _
        $region52: #{tpu_custom_call.1} parent=11 // pred_fallthru
          _
      $region12: #{tpu_custom_call.1} parent=5 // pred_fallthru
        _
      %p386 = scmp.lt.s32.totalorder %s26, 2
      // Predicated region
      $region53: #{tpu_custom_call.1} parent=5 // pred_check
        %p387 = pneg %p386
      $region54: #{tpu_custom_call.1} parent=5 // pred_check_branch
        %389 = sbr.rel (%p387) target = $region56
      $region55: #{tpu_custom_call.1} parent=5 // pred_region
        // Predicated region
        $region57: #{tpu_custom_call.1} parent=55 // pred_check
          %p390 = pneg %p46
        $region58: #{tpu_custom_call.1} parent=55 // pred_check_branch
          %392 = sbr.rel (%p390) target = $region60
        $region59: #{tpu_custom_call.1} parent=55 // pred_region
          %s393 = sand.u32 %s36, 1
          %s394 = scalar_lea.sflag [#allocation3], %s393
          %s395 = sand.u32 %s36, 1
          %s396 = smul.addr %s395, 16
          %s397 = scalar_lea.vmem [#allocation2], %s396
          %s398 = smul.u32 4, %s26
          %400 = vsyncadd %s394, 0
          %s401 = smul.addr %s398, 4
          %s402 = scalar_lea.hbm %s0, %s401
          %s403 = sshll.u32 %s402, 4
          %s404 = int_to_ptr.hbm [resolvable:$true] %s403
          %s405 = sshll.u32 %s397, 4
          %s406 = int_to_ptr.vmem [resolvable:$true] %s405
          %411 = dma.hbm_to_vmem [thread:$0]  %s404, 256, %s406, %s394, 64, 64, 4
        $region60: #{tpu_custom_call.1} parent=55 // pred_fallthru
          _
      $region56: #{tpu_custom_call.1} parent=5 // pred_fallthru
        _
      %p412 = scmp.le.s32.totalorder 1, %s26
      %p413 = scmp.lt.s32.totalorder %s26, 3
      %p414 = pnand %p412, %p413
      %p415 = pneg %p414
      // Predicated region
      $region61: #{tpu_custom_call.1} parent=5 // pred_check
        _
      $region62: #{tpu_custom_call.1} parent=5 // pred_check_branch
        %417 = sbr.rel (%p414) target = $region64
      $region63: #{tpu_custom_call.1} parent=5 // pred_region
        %s418 = ssub.s32 %s26, 1
        %s419 = sand.u32 %s39, 1
        %s420 = scalar_lea.sflag [#allocation3], %s419
        %s421 = sand.u32 %s39, 1
        %s422 = smul.addr %s421, 16
        %s423 = scalar_lea.vmem [#allocation2], %s422
        // Predicated region
        $region65: #{tpu_custom_call.1} parent=63 // pred_check
          %p424 = pneg %p52
        $region66: #{tpu_custom_call.1} parent=63 // pred_check_branch
          %426 = sbr.rel (%p424) target = $region68
        $region67: #{tpu_custom_call.1} parent=63 // pred_region
          %428 = dma.done %s420, 256
        $region68: #{tpu_custom_call.1} parent=63 // pred_fallthru
          _
        // Predicated region
        $region69: #{tpu_custom_call.1} parent=63 // pred_check
          %p429 = pneg %p73
        $region70: #{tpu_custom_call.1} parent=63 // pred_check_branch
          %431 = sbr.rel (%p429) target = $region72
        $region71: #{tpu_custom_call.1} parent=63 // pred_region
          %433 = dma.done [#allocation6], 16
        $region72: #{tpu_custom_call.1} parent=63 // pred_fallthru
          _
        // Predicated region
        $region73: #{tpu_custom_call.1} parent=63 // pred_check
          %p434 = pneg %p115
        $region74: #{tpu_custom_call.1} parent=63 // pred_check_branch
          %436 = sbr.rel (%p434) target = $region76
        $region75: #{tpu_custom_call.1} parent=63 // pred_region
          %438 = dma.done [#allocation6], 1024
        $region76: #{tpu_custom_call.1} parent=63 // pred_fallthru
          _
        // Predicated region
        $region77: #{tpu_custom_call.1} parent=63 // pred_check
          %p439 = pneg %p157
        $region78: #{tpu_custom_call.1} parent=63 // pred_check_branch
          %441 = sbr.rel (%p439) target = $region80
        $region79: #{tpu_custom_call.1} parent=63 // pred_region
          %443 = dma.done [#allocation9], 1024
        $region80: #{tpu_custom_call.1} parent=63 // pred_fallthru
          _
        // Predicated region
        $region81: #{tpu_custom_call.1} parent=63 // pred_check
          %p444 = pneg %p199
        $region82: #{tpu_custom_call.1} parent=63 // pred_check_branch
          %446 = sbr.rel (%p444) target = $region84
        $region83: #{tpu_custom_call.1} parent=63 // pred_region
          %448 = dma.done [#allocation9], 1024
        $region84: #{tpu_custom_call.1} parent=63 // pred_fallthru
          _
        // Predicated region
        $region85: #{tpu_custom_call.1} parent=63 // pred_check
          %p449 = pneg %p241
        $region86: #{tpu_custom_call.1} parent=63 // pred_check_branch
          %451 = sbr.rel (%p449) target = $region88
        $region87: #{tpu_custom_call.1} parent=63 // pred_region
          %453 = dma.done [#allocation12], 1024
        $region88: #{tpu_custom_call.1} parent=63 // pred_fallthru
          _
        %s454 = sand.u32 %s39, 1
        %s455 = scalar_lea.sflag [#allocation3], %s454
        %s456 = sand.u32 %s39, 1
        %s457 = smul.addr %s456, 16
        %s458 = scalar_lea.vmem [#allocation2], %s457
        %p459 = pneg %p52
        %p460 = pneg %p49
        %p461 = pneg %p73
        %p462 = pneg %p70
        %p463 = pneg %p94
        %p464 = pneg %p91
        %p465 = pneg %p115
        %p466 = pneg %p112
        %p467 = pneg %p136
        %p468 = pneg %p133
        %p469 = pneg %p157
        %p470 = pneg %p154
        %p471 = pneg %p178
        %p472 = pneg %p175
        %p473 = pneg %p199
        %p474 = pneg %p196
        %p475 = pneg %p220
        %p476 = pneg %p217
        %p477 = pneg %p241
        %p478 = pneg %p238
        %p479 = pneg %p262
        %p480 = pneg %p259
        %p481 = pneg %p288
        %p482 = pneg %p285
        %s483 = sand.u32 %s275, 1
        %s484 = scalar_lea.sflag [#allocation4], %s483
        %s485 = sand.u32 %s275, 1
        %s486 = smul.addr %s485, 32
        %s487 = scalar_lea.vmem [#allocation13], %s486
        %s488 = smul.u32 4, %s31
        %s489 = smul.u32 4, %s31
        %v490 = vld [vmem:[#allocation5] sm:$0x1]
        %v491 = vld [vmem:[%s2] sm:$0x1]
        %v492 = vld [vmem:[#allocation7] sm:$0xf]
        %v493 = vld [vmem:[#allocation7 + $0x4] sm:$0xf]
        %v494 = vld [vmem:[#allocation7 + $0x8] sm:$0xf]
        %v495 = vld [vmem:[#allocation7 + $0xc] sm:$0xf]
        %v496 = vld [vmem:[#allocation7 + $0x10] sm:$0xf]
        %v497 = vld [vmem:[#allocation7 + $0x14] sm:$0xf]
        %v498 = vld [vmem:[#allocation7 + $0x18] sm:$0xf]
        %v499 = vld [vmem:[#allocation7 + $0x1c] sm:$0xf]
        %v500 = vld [vmem:[#allocation7 + $0x20] sm:$0xf]
        %v501 = vld [vmem:[#allocation7 + $0x24] sm:$0xf]
        %v502 = vld [vmem:[#allocation7 + $0x28] sm:$0xf]
        %v503 = vld [vmem:[#allocation7 + $0x2c] sm:$0xf]
        %v504 = vld [vmem:[#allocation7 + $0x30] sm:$0xf]
        %v505 = vld [vmem:[#allocation7 + $0x34] sm:$0xf]
        %v506 = vld [vmem:[#allocation7 + $0x38] sm:$0xf]
        %v507 = vld [vmem:[#allocation7 + $0x3c] sm:$0xf]
        %v508 = vld [vmem:[%s4] sm:$0x1]
        %v509 = vld [vmem:[%s423] sm:$0xf]
        %v510 = vld [vmem:[%s423 + $0x4] sm:$0xf]
        %v511 = vld [vmem:[%s423 + $0x8] sm:$0xf]
        %v512 = vld [vmem:[%s423 + $0xc] sm:$0xf]
        %v514 = vperm.slane %v508, 0
        %v520 = vunpack.c.l.b16 %v509
        %v521 = vunpack.c.l.b16 %v510
        %v522 = vunpack.c.l.b16 %v511
        %v523 = vunpack.c.l.b16 %v512
        %v524 = vpack.c.b16 %v521, %v520
        %v525 = vpack.c.b16 %v523, %v522
        %v544 = vunpack.c.l.b16 %v492
        %v545 = vunpack.c.l.b16 %v493
        %v546 = vunpack.c.l.b16 %v494
        %v547 = vunpack.c.l.b16 %v495
        %v548 = vunpack.c.l.b16 %v496
        %v549 = vunpack.c.l.b16 %v497
        %v550 = vunpack.c.l.b16 %v498
        %v551 = vunpack.c.l.b16 %v499
        %v552 = vunpack.c.l.b16 %v500
        %v553 = vunpack.c.l.b16 %v501
        %v554 = vunpack.c.l.b16 %v502
        %v555 = vunpack.c.l.b16 %v503
        %v556 = vunpack.c.l.b16 %v504
        %v557 = vunpack.c.l.b16 %v505
        %v558 = vunpack.c.l.b16 %v506
        %v559 = vunpack.c.l.b16 %v507
        %v560 = vpack.c.b16 %v545, %v544
        %v561 = vpack.c.b16 %v547, %v546
        %v562 = vpack.c.b16 %v549, %v548
        %v563 = vpack.c.b16 %v551, %v550
        %v564 = vpack.c.b16 %v553, %v552
        %v565 = vpack.c.b16 %v555, %v554
        %v566 = vpack.c.b16 %v557, %v556
        %v567 = vpack.c.b16 %v559, %v558
        %576 = vmatpush.bf16.msra.mxu0 %v567
        %577 = vmatpush.bf16.msra.mxu0 %v566
        %578 = vmatpush.bf16.msra.mxu0 %v565
        %579 = vmatpush.bf16.msra.mxu0 %v564
        %580 = vmatpush.bf16.msra.mxu0 %v563
        %581 = vmatpush.bf16.msra.mxu0 %v562
        %582 = vmatpush.bf16.msra.mxu0 %v561
        %583 = vmatpush.bf16.msra.mxu0 %v560
        %584 = vmatmul.bf16.gmra.mxu0 %v524
        %v585 = vpop.f32.mrf.mxu0
        %v586 = vadd.f32 %v514, %v585
        %v587 = vpop.f32.mrf.mxu0
        %v588 = vadd.f32 %v514, %v587
        %589 = vmatmul.bf16.gmra.mxu0 %v525
        %v590 = vpop.f32.mrf.mxu0
        %v591 = vadd.f32 %v514, %v590
        %v592 = vpop.f32.mrf.mxu0
        %v593 = vadd.f32 %v514, %v592
        %594 = vdwg.mxu0
        %v595 = vmax.f32 %v586, 0.0
        %v596 = vmax.f32 %v588, 0.0
        %v597 = vmax.f32 %v591, 0.0
        %v598 = vmax.f32 %v593, 0.0
        %v599 = vpack.c.bf16 %v596, %v595
        %v600 = vpack.c.bf16 %v598, %v597
        %v601 = vld [vmem:[#allocation8] sm:$0xf]
        %v602 = vld [vmem:[#allocation8 + $0x4] sm:$0xf]
        %v603 = vld [vmem:[#allocation8 + $0x8] sm:$0xf]
        %v604 = vld [vmem:[#allocation8 + $0xc] sm:$0xf]
        %v605 = vld [vmem:[#allocation8 + $0x10] sm:$0xf]
        %v606 = vld [vmem:[#allocation8 + $0x14] sm:$0xf]
        %v607 = vld [vmem:[#allocation8 + $0x18] sm:$0xf]
        %v608 = vld [vmem:[#allocation8 + $0x1c] sm:$0xf]
        %v609 = vld [vmem:[#allocation8 + $0x20] sm:$0xf]
        %v610 = vld [vmem:[#allocation8 + $0x24] sm:$0xf]
        %v611 = vld [vmem:[#allocation8 + $0x28] sm:$0xf]
        %v612 = vld [vmem:[#allocation8 + $0x2c] sm:$0xf]
        %v613 = vld [vmem:[#allocation8 + $0x30] sm:$0xf]
        %v614 = vld [vmem:[#allocation8 + $0x34] sm:$0xf]
        %v615 = vld [vmem:[#allocation8 + $0x38] sm:$0xf]
        %v616 = vld [vmem:[#allocation8 + $0x3c] sm:$0xf]
        %v617 = vld [vmem:[%s6] sm:$0x1]
        %v619 = vperm.slane %v617, 0
        %v637 = vunpack.c.l.b16 %v601
        %v638 = vunpack.c.l.b16 %v602
        %v639 = vunpack.c.l.b16 %v603
        %v640 = vunpack.c.l.b16 %v604
        %v641 = vunpack.c.l.b16 %v605
        %v642 = vunpack.c.l.b16 %v606
        %v643 = vunpack.c.l.b16 %v607
        %v644 = vunpack.c.l.b16 %v608
        %v645 = vunpack.c.l.b16 %v609
        %v646 = vunpack.c.l.b16 %v610
        %v647 = vunpack.c.l.b16 %v611
        %v648 = vunpack.c.l.b16 %v612
        %v649 = vunpack.c.l.b16 %v613
        %v650 = vunpack.c.l.b16 %v614
        %v651 = vunpack.c.l.b16 %v615
        %v652 = vunpack.c.l.b16 %v616
        %v653 = vpack.c.b16 %v638, %v637
        %v654 = vpack.c.b16 %v640, %v639
        %v655 = vpack.c.b16 %v642, %v641
        %v656 = vpack.c.b16 %v644, %v643
        %v657 = vpack.c.b16 %v646, %v645
        %v658 = vpack.c.b16 %v648, %v647
        %v659 = vpack.c.b16 %v650, %v649
        %v660 = vpack.c.b16 %v652, %v651
        %669 = vmatpush.bf16.msra.mxu0 %v660
        %670 = vmatpush.bf16.msra.mxu0 %v659
        %671 = vmatpush.bf16.msra.mxu0 %v658
        %672 = vmatpush.bf16.msra.mxu0 %v657
        %673 = vmatpush.bf16.msra.mxu0 %v656
        %674 = vmatpush.bf16.msra.mxu0 %v655
        %675 = vmatpush.bf16.msra.mxu0 %v654
        %676 = vmatpush.bf16.msra.mxu0 %v653
        %677 = vmatmul.bf16.gmra.mxu0 %v599
        %v678 = vpop.f32.mrf.mxu0
        %v679 = vadd.f32 %v619, %v678
        %v680 = vpop.f32.mrf.mxu0
        %v681 = vadd.f32 %v619, %v680
        %682 = vmatmul.bf16.gmra.mxu0 %v600
        %v683 = vpop.f32.mrf.mxu0
        %v684 = vadd.f32 %v619, %v683
        %v685 = vpop.f32.mrf.mxu0
        %v686 = vadd.f32 %v619, %v685
        %687 = vdwg.mxu0
        %688 = vadd.xlane.f32.xlu0 %v679
        %v689 = vpop.xlane.xlu0 %688
        %690 = vadd.xlane.f32.xlu0 %v681
        %v691 = vpop.xlane.xlu0 %690
        %692 = vadd.xlane.f32.xlu0 %v684
        %v693 = vpop.xlane.xlu0 %692
        %694 = vadd.xlane.f32.xlu0 %v686
        %v695 = vpop.xlane.xlu0 %694
        %v696 = vrcp.pop 128.0
        %v697 = vmul.f32 128.0, %v696
        %v698 = vsub.f32 1.0, %v697
        %v699 = vmul.f32 %v696, %v698
        %v700 = vadd.f32 %v696, %v699
        %vm701 = vweird.f32 %v696
        %v702 = vsel %vm701, %v696, %v700
        %v703 = vmul.f32 %v689, %v702
        %v704 = vmul.f32 %v691, %v702
        %v705 = vmul.f32 %v693, %v702
        %v706 = vmul.f32 %v695, %v702
        %v707 = vmul.f32 %v679, %v679
        %v708 = vmul.f32 %v681, %v681
        %v709 = vmul.f32 %v684, %v684
        %v710 = vmul.f32 %v686, %v686
        %711 = vadd.xlane.f32.xlu0 %v707
        %v712 = vpop.xlane.xlu0 %711
        %713 = vadd.xlane.f32.xlu0 %v708
        %v714 = vpop.xlane.xlu0 %713
        %715 = vadd.xlane.f32.xlu0 %v709
        %v716 = vpop.xlane.xlu0 %715
        %717 = vadd.xlane.f32.xlu0 %v710
        %v718 = vpop.xlane.xlu0 %717
        %v719 = vmul.f32 %v712, %v702
        %v720 = vmul.f32 %v714, %v702
        %v721 = vmul.f32 %v716, %v702
        %v722 = vmul.f32 %v718, %v702
        %v723 = vmul.f32 %v703, %v703
        %v724 = vmul.f32 %v704, %v704
        %v725 = vmul.f32 %v705, %v705
        %v726 = vmul.f32 %v706, %v706
        %v727 = vsub.f32 %v719, %v723
        %v728 = vsub.f32 %v720, %v724
        %v729 = vsub.f32 %v721, %v725
        %v730 = vsub.f32 %v722, %v726
        %v731 = vadd.f32 %v727, 1e-05
        %v732 = vadd.f32 %v728, 1e-05
        %v733 = vadd.f32 %v729, 1e-05
        %v734 = vadd.f32 %v730, 1e-05
        %v735 = vrsqrt.pop %v731
        %v736 = vmul.f32 %v735, %v731
        %v737 = vmul.f32 %v736, %v735
        %v738 = vmul.f32 0.5, %v737
        %v739 = vsub.f32 1.5, %v738
        %v740 = vmul.f32 %v735, %v739
        %vm741 = vweird.f32 %v731
        %vm742 = vweird.f32 %v735
        %vm743 = vmor %vm741, %vm742
        %v744 = vsel %vm743, %v735, %v740
        %v745 = vrsqrt.pop %v732
        %v746 = vmul.f32 %v745, %v732
        %v747 = vmul.f32 %v746, %v745
        %v748 = vmul.f32 0.5, %v747
        %v749 = vsub.f32 1.5, %v748
        %v750 = vmul.f32 %v745, %v749
        %vm751 = vweird.f32 %v732
        %vm752 = vweird.f32 %v745
        %vm753 = vmor %vm751, %vm752
        %v754 = vsel %vm753, %v745, %v750
        %v755 = vrsqrt.pop %v733
        %v756 = vmul.f32 %v755, %v733
        %v757 = vmul.f32 %v756, %v755
        %v758 = vmul.f32 0.5, %v757
        %v759 = vsub.f32 1.5, %v758
        %v760 = vmul.f32 %v755, %v759
        %vm761 = vweird.f32 %v733
        %vm762 = vweird.f32 %v755
        %vm763 = vmor %vm761, %vm762
        %v764 = vsel %vm763, %v755, %v760
        %v765 = vrsqrt.pop %v734
        %v766 = vmul.f32 %v765, %v734
        %v767 = vmul.f32 %v766, %v765
        %v768 = vmul.f32 0.5, %v767
        %v769 = vsub.f32 1.5, %v768
        %v770 = vmul.f32 %v765, %v769
        %vm771 = vweird.f32 %v734
        %vm772 = vweird.f32 %v765
        %vm773 = vmor %vm771, %vm772
        %v774 = vsel %vm773, %v765, %v770
        %v775 = vsub.f32 %v679, %v703
        %v776 = vsub.f32 %v681, %v704
        %v777 = vsub.f32 %v684, %v705
        %v778 = vsub.f32 %v686, %v706
        %v779 = vmul.f32 %v775, %v744
        %v780 = vmul.f32 %v776, %v754
        %v781 = vmul.f32 %v777, %v764
        %v782 = vmul.f32 %v778, %v774
        %v784 = vperm.slane %v490, 0
        %v786 = vmul.f32 %v779, %v784
        %v787 = vmul.f32 %v780, %v784
        %v788 = vmul.f32 %v781, %v784
        %v789 = vmul.f32 %v782, %v784
        %v791 = vperm.slane %v491, 0
        %v793 = vadd.f32 %v786, %v791
        %v794 = vadd.f32 %v787, %v791
        %v795 = vadd.f32 %v788, %v791
        %v796 = vadd.f32 %v789, %v791
        %v797 = vmax.f32 %v793, 0.0
        %v798 = vmax.f32 %v794, 0.0
        %v799 = vmax.f32 %v795, 0.0
        %v800 = vmax.f32 %v796, 0.0
        %v801 = vpack.c.bf16 %v798, %v797
        %v802 = vpack.c.bf16 %v800, %v799
        %v803 = vld [vmem:[#allocation10] sm:$0xf]
        %v804 = vld [vmem:[#allocation10 + $0x4] sm:$0xf]
        %v805 = vld [vmem:[#allocation10 + $0x8] sm:$0xf]
        %v806 = vld [vmem:[#allocation10 + $0xc] sm:$0xf]
        %v807 = vld [vmem:[#allocation10 + $0x10] sm:$0xf]
        %v808 = vld [vmem:[#allocation10 + $0x14] sm:$0xf]
        %v809 = vld [vmem:[#allocation10 + $0x18] sm:$0xf]
        %v810 = vld [vmem:[#allocation10 + $0x1c] sm:$0xf]
        %v811 = vld [vmem:[#allocation10 + $0x20] sm:$0xf]
        %v812 = vld [vmem:[#allocation10 + $0x24] sm:$0xf]
        %v813 = vld [vmem:[#allocation10 + $0x28] sm:$0xf]
        %v814 = vld [vmem:[#allocation10 + $0x2c] sm:$0xf]
        %v815 = vld [vmem:[#allocation10 + $0x30] sm:$0xf]
        %v816 = vld [vmem:[#allocation10 + $0x34] sm:$0xf]
        %v817 = vld [vmem:[#allocation10 + $0x38] sm:$0xf]
        %v818 = vld [vmem:[#allocation10 + $0x3c] sm:$0xf]
        %v819 = vld [vmem:[%s8] sm:$0x1]
        %v821 = vperm.slane %v819, 0
        %v839 = vunpack.c.l.b16 %v803
        %v840 = vunpack.c.l.b16 %v804
        %v841 = vunpack.c.l.b16 %v805
        %v842 = vunpack.c.l.b16 %v806
        %v843 = vunpack.c.l.b16 %v807
        %v844 = vunpack.c.l.b16 %v808
        %v845 = vunpack.c.l.b16 %v809
        %v846 = vunpack.c.l.b16 %v810
        %v847 = vunpack.c.l.b16 %v811
        %v848 = vunpack.c.l.b16 %v812
        %v849 = vunpack.c.l.b16 %v813
        %v850 = vunpack.c.l.b16 %v814
        %v851 = vunpack.c.l.b16 %v815
        %v852 = vunpack.c.l.b16 %v816
        %v853 = vunpack.c.l.b16 %v817
        %v854 = vunpack.c.l.b16 %v818
        %v855 = vpack.c.b16 %v840, %v839
        %v856 = vpack.c.b16 %v842, %v841
        %v857 = vpack.c.b16 %v844, %v843
        %v858 = vpack.c.b16 %v846, %v845
        %v859 = vpack.c.b16 %v848, %v847
        %v860 = vpack.c.b16 %v850, %v849
        %v861 = vpack.c.b16 %v852, %v851
        %v862 = vpack.c.b16 %v854, %v853
        %871 = vmatpush.bf16.msra.mxu0 %v862
        %872 = vmatpush.bf16.msra.mxu0 %v861
        %873 = vmatpush.bf16.msra.mxu0 %v860
        %874 = vmatpush.bf16.msra.mxu0 %v859
        %875 = vmatpush.bf16.msra.mxu0 %v858
        %876 = vmatpush.bf16.msra.mxu0 %v857
        %877 = vmatpush.bf16.msra.mxu0 %v856
        %878 = vmatpush.bf16.msra.mxu0 %v855
        %879 = vmatmul.bf16.gmra.mxu0 %v801
        %v880 = vpop.f32.mrf.mxu0
        %v881 = vadd.f32 %v821, %v880
        %v882 = vpop.f32.mrf.mxu0
        %v883 = vadd.f32 %v821, %v882
        %884 = vmatmul.bf16.gmra.mxu0 %v802
        %v885 = vpop.f32.mrf.mxu0
        %v886 = vadd.f32 %v821, %v885
        %v887 = vpop.f32.mrf.mxu0
        %v888 = vadd.f32 %v821, %v887
        %889 = vdwg.mxu0
        %890 = vadd.xlane.f32.xlu0 %v881
        %v891 = vpop.xlane.xlu0 %890
        %892 = vadd.xlane.f32.xlu0 %v883
        %v893 = vpop.xlane.xlu0 %892
        %894 = vadd.xlane.f32.xlu0 %v886
        %v895 = vpop.xlane.xlu0 %894
        %896 = vadd.xlane.f32.xlu0 %v888
        %v897 = vpop.xlane.xlu0 %896
        %v898 = vmul.f32 %v891, %v702
        %v899 = vmul.f32 %v893, %v702
        %v900 = vmul.f32 %v895, %v702
        %v901 = vmul.f32 %v897, %v702
        %v902 = vmul.f32 %v881, %v881
        %v903 = vmul.f32 %v883, %v883
        %v904 = vmul.f32 %v886, %v886
        %v905 = vmul.f32 %v888, %v888
        %906 = vadd.xlane.f32.xlu0 %v902
        %v907 = vpop.xlane.xlu0 %906
        %908 = vadd.xlane.f32.xlu0 %v903
        %v909 = vpop.xlane.xlu0 %908
        %910 = vadd.xlane.f32.xlu0 %v904
        %v911 = vpop.xlane.xlu0 %910
        %912 = vadd.xlane.f32.xlu0 %v905
        %v913 = vpop.xlane.xlu0 %912
        %v914 = vmul.f32 %v907, %v702
        %v915 = vmul.f32 %v909, %v702
        %v916 = vmul.f32 %v911, %v702
        %v917 = vmul.f32 %v913, %v702
        %v918 = vmul.f32 %v898, %v898
        %v919 = vmul.f32 %v899, %v899
        %v920 = vmul.f32 %v900, %v900
        %v921 = vmul.f32 %v901, %v901
        %v922 = vsub.f32 %v914, %v918
        %v923 = vsub.f32 %v915, %v919
        %v924 = vsub.f32 %v916, %v920
        %v925 = vsub.f32 %v917, %v921
        %v926 = vadd.f32 %v922, 1e-05
        %v927 = vadd.f32 %v923, 1e-05
        %v928 = vadd.f32 %v924, 1e-05
        %v929 = vadd.f32 %v925, 1e-05
        %v930 = vrsqrt.pop %v926
        %v931 = vmul.f32 %v930, %v926
        %v932 = vmul.f32 %v931, %v930
        %v933 = vmul.f32 0.5, %v932
        %v934 = vsub.f32 1.5, %v933
        %v935 = vmul.f32 %v930, %v934
        %vm936 = vweird.f32 %v926
        %vm937 = vweird.f32 %v930
        %vm938 = vmor %vm936, %vm937
        %v939 = vsel %vm938, %v930, %v935
        %v940 = vrsqrt.pop %v927
        %v941 = vmul.f32 %v940, %v927
        %v942 = vmul.f32 %v941, %v940
        %v943 = vmul.f32 0.5, %v942
        %v944 = vsub.f32 1.5, %v943
        %v945 = vmul.f32 %v940, %v944
        %vm946 = vweird.f32 %v927
        %vm947 = vweird.f32 %v940
        %vm948 = vmor %vm946, %vm947
        %v949 = vsel %vm948, %v940, %v945
        %v950 = vrsqrt.pop %v928
        %v951 = vmul.f32 %v950, %v928
        %v952 = vmul.f32 %v951, %v950
        %v953 = vmul.f32 0.5, %v952
        %v954 = vsub.f32 1.5, %v953
        %v955 = vmul.f32 %v950, %v954
        %vm956 = vweird.f32 %v928
        %vm957 = vweird.f32 %v950
        %vm958 = vmor %vm956, %vm957
        %v959 = vsel %vm958, %v950, %v955
        %v960 = vrsqrt.pop %v929
        %v961 = vmul.f32 %v960, %v929
        %v962 = vmul.f32 %v961, %v960
        %v963 = vmul.f32 0.5, %v962
        %v964 = vsub.f32 1.5, %v963
        %v965 = vmul.f32 %v960, %v964
        %vm966 = vweird.f32 %v929
        %vm967 = vweird.f32 %v960
        %vm968 = vmor %vm966, %vm967
        %v969 = vsel %vm968, %v960, %v965
        %v970 = vsub.f32 %v881, %v898
        %v971 = vsub.f32 %v883, %v899
        %v972 = vsub.f32 %v886, %v900
        %v973 = vsub.f32 %v888, %v901
        %v974 = vmul.f32 %v970, %v939
        %v975 = vmul.f32 %v971, %v949
        %v976 = vmul.f32 %v972, %v959
        %v977 = vmul.f32 %v973, %v969
        %v978 = vmul.f32 %v974, %v784
        %v979 = vmul.f32 %v975, %v784
        %v980 = vmul.f32 %v976, %v784
        %v981 = vmul.f32 %v977, %v784
        %v982 = vadd.f32 %v978, %v791
        %v983 = vadd.f32 %v979, %v791
        %v984 = vadd.f32 %v980, %v791
        %v985 = vadd.f32 %v981, %v791
        %v986 = vmax.f32 %v982, 0.0
        %v987 = vmax.f32 %v983, 0.0
        %v988 = vmax.f32 %v984, 0.0
        %v989 = vmax.f32 %v985, 0.0
        %v990 = vpack.c.bf16 %v987, %v986
        %v991 = vpack.c.bf16 %v989, %v988
        %v992 = vld [vmem:[#allocation11] sm:$0xf]
        %v993 = vld [vmem:[#allocation11 + $0x4] sm:$0xf]
        %v994 = vld [vmem:[#allocation11 + $0x8] sm:$0xf]
        %v995 = vld [vmem:[#allocation11 + $0xc] sm:$0xf]
        %v996 = vld [vmem:[#allocation11 + $0x10] sm:$0xf]
        %v997 = vld [vmem:[#allocation11 + $0x14] sm:$0xf]
        %v998 = vld [vmem:[#allocation11 + $0x18] sm:$0xf]
        %v999 = vld [vmem:[#allocation11 + $0x1c] sm:$0xf]
        %v1000 = vld [vmem:[#allocation11 + $0x20] sm:$0xf]
        %v1001 = vld [vmem:[#allocation11 + $0x24] sm:$0xf]
        %v1002 = vld [vmem:[#allocation11 + $0x28] sm:$0xf]
        %v1003 = vld [vmem:[#allocation11 + $0x2c] sm:$0xf]
        %v1004 = vld [vmem:[#allocation11 + $0x30] sm:$0xf]
        %v1005 = vld [vmem:[#allocation11 + $0x34] sm:$0xf]
        %v1006 = vld [vmem:[#allocation11 + $0x38] sm:$0xf]
        %v1007 = vld [vmem:[#allocation11 + $0x3c] sm:$0xf]
        %v1008 = vld [vmem:[%s10] sm:$0x1]
        %v1010 = vperm.slane %v1008, 0
        %v1028 = vunpack.c.l.b16 %v992
        %v1029 = vunpack.c.l.b16 %v993
        %v1030 = vunpack.c.l.b16 %v994
        %v1031 = vunpack.c.l.b16 %v995
        %v1032 = vunpack.c.l.b16 %v996
        %v1033 = vunpack.c.l.b16 %v997
        %v1034 = vunpack.c.l.b16 %v998
        %v1035 = vunpack.c.l.b16 %v999
        %v1036 = vunpack.c.l.b16 %v1000
        %v1037 = vunpack.c.l.b16 %v1001
        %v1038 = vunpack.c.l.b16 %v1002
        %v1039 = vunpack.c.l.b16 %v1003
        %v1040 = vunpack.c.l.b16 %v1004
        %v1041 = vunpack.c.l.b16 %v1005
        %v1042 = vunpack.c.l.b16 %v1006
        %v1043 = vunpack.c.l.b16 %v1007
        %v1044 = vpack.c.b16 %v1029, %v1028
        %v1045 = vpack.c.b16 %v1031, %v1030
        %v1046 = vpack.c.b16 %v1033, %v1032
        %v1047 = vpack.c.b16 %v1035, %v1034
        %v1048 = vpack.c.b16 %v1037, %v1036
        %v1049 = vpack.c.b16 %v1039, %v1038
        %v1050 = vpack.c.b16 %v1041, %v1040
        %v1051 = vpack.c.b16 %v1043, %v1042
        %1060 = vmatpush.bf16.msra.mxu0 %v1051
        %1061 = vmatpush.bf16.msra.mxu0 %v1050
        %1062 = vmatpush.bf16.msra.mxu0 %v1049
        %1063 = vmatpush.bf16.msra.mxu0 %v1048
        %1064 = vmatpush.bf16.msra.mxu0 %v1047
        %1065 = vmatpush.bf16.msra.mxu0 %v1046
        %1066 = vmatpush.bf16.msra.mxu0 %v1045
        %1067 = vmatpush.bf16.msra.mxu0 %v1044
        %1068 = vmatmul.bf16.gmra.mxu0 %v990
        %v1069 = vpop.f32.mrf.mxu0
        %v1070 = vadd.f32 %v1010, %v1069
        %v1071 = vpop.f32.mrf.mxu0
        %v1072 = vadd.f32 %v1010, %v1071
        %1073 = vmatmul.bf16.gmra.mxu0 %v991
        %v1074 = vpop.f32.mrf.mxu0
        %v1075 = vadd.f32 %v1010, %v1074
        %v1076 = vpop.f32.mrf.mxu0
        %v1077 = vadd.f32 %v1010, %v1076
        %1078 = vdwg.mxu0
        %1079 = vst [vmem:[%s487] sm:$0xff] %v1070
        %1080 = vst [vmem:[%s487 + $0x8] sm:$0xff] %v1072
        %1081 = vst [vmem:[%s487 + $0x10] sm:$0xff] %v1075
        %1082 = vst [vmem:[%s487 + $0x18] sm:$0xff] %v1077
        %s1083 = sand.u32 %s275, 1
        %s1084 = scalar_lea.sflag [#allocation4], %s1083
        %s1085 = sand.u32 %s275, 1
        %s1086 = smul.addr %s1085, 32
        %s1087 = scalar_lea.vmem [#allocation13], %s1086
        // Predicated region
        $region89: #{tpu_custom_call.1} parent=63 // pred_check
          %p1088 = pneg %p285
        $region90: #{tpu_custom_call.1} parent=63 // pred_check_branch
          %1090 = sbr.rel (%p1088) target = $region92
        $region91: #{tpu_custom_call.1} parent=63 // pred_region
          %s1091 = smul.u32 4, %s31
          %1093 = vsyncadd %s1084, 0
          %s1094 = smul.addr %s1091, 8
          %s1095 = scalar_lea.hbm %s11, %s1094
          %s1096 = sshll.u32 %s1087, 4
          %s1097 = int_to_ptr.vmem [resolvable:$true] %s1096
          %s1098 = sshll.u32 %s1095, 4
          %s1099 = int_to_ptr.hbm [resolvable:$true] %s1098
          %1104 = dma.vmem_to_hbm [thread:$0]  %s1097, 512, %s1099, %s1084, 128, 128, 8
        $region92: #{tpu_custom_call.1} parent=63 // pred_fallthru
          _
      $region64: #{tpu_custom_call.1} parent=5 // pred_fallthru
        _
      %p1105 = scmp.le.s32.totalorder 2, %s26
      // Predicated region
      $region93: #{tpu_custom_call.1} parent=5 // pred_check
        %p1106 = pneg %p1105
      $region94: #{tpu_custom_call.1} parent=5 // pred_check_branch
        %1108 = sbr.rel (%p1106) target = $region96
      $region95: #{tpu_custom_call.1} parent=5 // pred_region
        %s1109 = ssub.s32 %s26, 2
        // Predicated region
        $region97: #{tpu_custom_call.1} parent=95 // pred_check
          %p1110 = pneg %p291
        $region98: #{tpu_custom_call.1} parent=95 // pred_check_branch
          %1112 = sbr.rel (%p1110) target = $region100
        $region99: #{tpu_custom_call.1} parent=95 // pred_region
          %s1113 = sand.u32 %s276, 1
          %s1114 = scalar_lea.sflag [#allocation4], %s1113
          %s1115 = sand.u32 %s276, 1
          %s1116 = smul.addr %s1115, 32
          %s1117 = scalar_lea.vmem [#allocation13], %s1116
          %1119 = dma.done %s1114, 512
        $region100: #{tpu_custom_call.1} parent=95 // pred_fallthru
          _
      $region96: #{tpu_custom_call.1} parent=5 // pred_fallthru
        _
    $region6: #{tpu_custom_call.1} parent=1 // loop_footer
      %s30 = sadd.s32 1, %s26
    $region7: #{tpu_custom_call.1} parent=1 // loop_footer_branch
      %25 = sbr.rel target = $region3
    $region8: #{tpu_custom_call.1} parent=1 // loop_exit
      _
    %1120 = vsyncpa [#allocation3], 1
    %s1121 = scalar_lea.sflag [#allocation3], 1
    %1122 = vsyncpa %s1121, 1
    %1123 = vsyncpa [#allocation6], 1
    %1124 = vsyncpa [#allocation9], 1
    %1125 = vsyncpa [#allocation12], 1
    %1126 = vsyncpa [#allocation4], 1
    %s1127 = scalar_lea.sflag [#allocation4], 1
    %1128 = vsyncpa %s1127, 1

// kernel: tpu_custom_call.1
$region0: #{tpu_custom_call.1}
  #allocation0 [shape = 'u32[]', space=smem, size = 0x4, offset = 0x4, fixed_abs, tag = 'smem constant byte address 0x4 - core index']
  #allocation1 [shape = 'u32[72,128]{1,0:T(1,128)}', space=vmem, size = 0x9000, scoped, tag = 'internal scratch']
  %s0 = inlined_call_operand.hbm [shape: bf16[64,128], index: 0, kind: input, shape index: {}]
  %s1 = inlined_call_operand.hbm [shape: f32[1,128], index: 1, kind: input, shape index: {}]
  %s2 = inlined_call_operand.vmem [shape: f32[1,128], index: 2, kind: input, shape index: {}]
  %s3 = inlined_call_operand.hbm [shape: bf16[128,128], index: 3, kind: input, shape index: {}]
  %s4 = inlined_call_operand.vmem [shape: f32[1,128], index: 4, kind: input, shape index: {}]
  %s5 = inlined_call_operand.hbm [shape: bf16[128,128], index: 5, kind: input, shape index: {}]
  %s6 = inlined_call_operand.vmem [shape: f32[1,128], index: 6, kind: input, shape index: {}]
  %s7 = inlined_call_operand.hbm [shape: bf16[128,128], index: 7, kind: input, shape index: {}]
  %s8 = inlined_call_operand.vmem [shape: f32[1,128], index: 8, kind: input, shape index: {}]
  %s9 = inlined_call_operand.hbm [shape: bf16[128,128], index: 9, kind: input, shape index: {}]
  %s10 = inlined_call_operand.vmem [shape: f32[1,128], index: 10, kind: input, shape index: {}]
  %s11 = inlined_call_operand.hbm [shape: f32[64,128], index: 11, kind: output, shape index: {}]
  %s12 = sld [smem:[#allocation0]]
  $region101: #{tpu_custom_call.1} parent=0
    _
  %s14 = ssub.s32 1, %s12
  %s15 = scalar_select 0, %s14, %s12
  $region1: #{tpu_custom_call.1} parent=0
    #allocation2 [shape = 'u8[16384]{0}', space=vmem, size = 0x4000, scoped, tag = 'input window, operand 0']
    #allocation3 [shape = 's32[2]{0}', space=sflag, size = 0x8, scoped, tag = 'scoped memory for tpu_custom_call.1']
    #allocation4 [shape = 's32[2]{0}', space=sflag, size = 0x8, scoped, tag = 'scoped memory for tpu_custom_call.1']
    #allocation5 [shape = 'u8[512]{0}', space=vmem, size = 0x400, scoped, tag = 'input window, operand 1, single buffered']
    #allocation6 [shape = 's32[1]{0}', space=sflag, size = 0x4, scoped, tag = 'scoped memory for tpu_custom_call.1']
    #allocation7 [shape = 'u8[32768]{0}', space=vmem, size = 0x8000, scoped, tag = 'input window, operand 3, single buffered']
    #allocation8 [shape = 'u8[32768]{0}', space=vmem, size = 0x8000, scoped, tag = 'input window, operand 5, single buffered']
    #allocation9 [shape = 's32[1]{0}', space=sflag, size = 0x4, scoped, tag = 'scoped memory for tpu_custom_call.1']
    #allocation10 [shape = 'u8[32768]{0}', space=vmem, size = 0x8000, scoped, tag = 'input window, operand 7, single buffered']
    #allocation11 [shape = 'u8[32768]{0}', space=vmem, size = 0x8000, scoped, tag = 'input window, operand 9, single buffered']
    #allocation12 [shape = 's32[1]{0}', space=sflag, size = 0x4, scoped, tag = 'scoped memory for tpu_custom_call.1']
    #allocation13 [shape = 'u8[32768]{0}', space=vmem, size = 0x8000, scoped, tag = 'output window, operand 0']
    %16 = vsyncpa [#allocation3], 0
    %s17 = scalar_lea.sflag [#allocation3], 1
    %18 = vsyncpa %s17, 0
    %19 = vsyncpa [#allocation6], 0
    %20 = vsyncpa [#allocation9], 0
    %21 = vsyncpa [#allocation12], 0
    %22 = vsyncpa [#allocation4], 0
    %s23 = scalar_lea.sflag [#allocation4], 1
    %24 = vsyncpa %s23, 0
    loop: start=0, step=1, limit=4
    $region2: #{tpu_custom_call.1} parent=1 // loop_pre_header
      _
    $region3: #{tpu_custom_call.1} parent=1 // loop_header
      %s26 = sphi 0, %s30
      %p27 = scmp.ge.s32.totalorder %s26, 4
      %s36 = sphi 0, %s38
      %s39 = sphi 0, %s36
      %s40 = sphi 0, %s39
      %s56 = sphi 0, %s40
      %s60 = sphi 0, %s60
      %s62 = sphi 0, %s60
      %s63 = sphi 0, %s62
      %s77 = sphi 0, %s63
      %s81 = sphi 0, %s81
      %s83 = sphi 0, %s81
      %s84 = sphi 0, %s83
      %s98 = sphi 0, %s84
      %s102 = sphi 0, %s102
      %s104 = sphi 0, %s102
      %s105 = sphi 0, %s104
      %s119 = sphi 0, %s105
      %s123 = sphi 0, %s123
      %s125 = sphi 0, %s123
      %s126 = sphi 0, %s125
      %s140 = sphi 0, %s126
      %s144 = sphi 0, %s144
      %s146 = sphi 0, %s144
      %s147 = sphi 0, %s146
      %s161 = sphi 0, %s147
      %s165 = sphi 0, %s165
      %s167 = sphi 0, %s165
      %s168 = sphi 0, %s167
      %s182 = sphi 0, %s168
      %s186 = sphi 0, %s186
      %s188 = sphi 0, %s186
      %s189 = sphi 0, %s188
      %s203 = sphi 0, %s189
      %s207 = sphi 0, %s207
      %s209 = sphi 0, %s207
      %s210 = sphi 0, %s209
      %s224 = sphi 0, %s210
      %s228 = sphi 0, %s228
      %s230 = sphi 0, %s228
      %s231 = sphi 0, %s230
      %s245 = sphi 0, %s231
      %s249 = sphi 0, %s249
      %s251 = sphi 0, %s249
      %s252 = sphi 0, %s251
      %s266 = sphi 0, %s252
      %s272 = sphi 0, %s274
      %s275 = sphi 0, %s272
      %s276 = sphi 0, %s275
      %s292 = sphi 0, %s276
    $region4: #{tpu_custom_call.1} parent=1 // loop_header_branch
      %29 = sbr.rel (%p27) target = $region8
    $region5: #{tpu_custom_call.1} parent=1 // loop_body
      %s31 = ssub.s32 %s26, 1
      %s32 = ssub.s32 %s26, 2
      %s33 = sadd.s32 %s26, 1
      %s34 = ssub.s32 %s26, %s33
      %p35 = scmp.eq.s32.totalorder %s34, 0
      %s37 = sadd.s32 %s36, 1
      %s38 = scalar_select %p35, %s36, %s37
      %p41 = pneg %p35
      %p42 = scmp.eq.s32.totalorder %s26, 1
      %p43 = por %p41, %p42
      %p44 = scmp.ne.s32.totalorder %s36, %s39
      %p45 = scmp.eq.s32.totalorder %s26, 0
      %p46 = por %p44, %p45
      %p47 = scmp.ne.s32.totalorder %s36, %s39
      %p48 = scmp.eq.s32.totalorder %s31, 1
      %p49 = por %p47, %p48
      %p50 = scmp.ne.s32.totalorder %s39, %s40
      %p51 = scmp.eq.s32.totalorder %s31, 0
      %p52 = por %p50, %p51
      %p53 = scmp.ne.s32.totalorder %s39, %s40
      %p54 = scmp.eq.s32.totalorder %s32, 1
      %p55 = por %p53, %p54
      %p57 = scmp.ne.s32.totalorder %s40, %s56
      %p58 = scmp.eq.s32.totalorder %s32, 0
      %p59 = por %p57, %p58
      %s61 = sadd.s32 %s60, 1
      %p64 = scmp.eq.s32.totalorder %s26, 1
      %p65 = scmp.ne.s32.totalorder %s60, %s62
      %p66 = scmp.eq.s32.totalorder %s26, 0
      %p67 = por %p65, %p66
      %p68 = scmp.ne.s32.totalorder %s60, %s62
      %p69 = scmp.eq.s32.totalorder %s31, 1
      %p70 = por %p68, %p69
      %p71 = scmp.ne.s32.totalorder %s62, %s63
      %p72 = scmp.eq.s32.totalorder %s31, 0
      %p73 = por %p71, %p72
      %p74 = scmp.ne.s32.totalorder %s62, %s63
      %p75 = scmp.eq.s32.totalorder %s32, 1
      %p76 = por %p74, %p75
      %p78 = scmp.ne.s32.totalorder %s63, %s77
      %p79 = scmp.eq.s32.totalorder %s32, 0
      %p80 = por %p78, %p79
      %s82 = sadd.s32 %s81, 1
      %p85 = scmp.eq.s32.totalorder %s26, 1
      %p86 = scmp.ne.s32.totalorder %s81, %s83
      %p87 = scmp.eq.s32.totalorder %s26, 0
      %p88 = por %p86, %p87
      %p89 = scmp.ne.s32.totalorder %s81, %s83
      %p90 = scmp.eq.s32.totalorder %s31, 1
      %p91 = por %p89, %p90
      %p92 = scmp.ne.s32.totalorder %s83, %s84
      %p93 = scmp.eq.s32.totalorder %s31, 0
      %p94 = por %p92, %p93
      %p95 = scmp.ne.s32.totalorder %s83, %s84
      %p96 = scmp.eq.s32.totalorder %s32, 1
      %p97 = por %p95, %p96
      %p99 = scmp.ne.s32.totalorder %s84, %s98
      %p100 = scmp.eq.s32.totalorder %s32, 0
      %p101 = por %p99, %p100
      %s103 = sadd.s32 %s102, 1
      %p106 = scmp.eq.s32.totalorder %s26, 1
      %p107 = scmp.ne.s32.totalorder %s102, %s104
      %p108 = scmp.eq.s32.totalorder %s26, 0
      %p109 = por %p107, %p108
      %p110 = scmp.ne.s32.totalorder %s102, %s104
      %p111 = scmp.eq.s32.totalorder %s31, 1
      %p112 = por %p110, %p111
      %p113 = scmp.ne.s32.totalorder %s104, %s105
      %p114 = scmp.eq.s32.totalorder %s31, 0
      %p115 = por %p113, %p114
      %p116 = scmp.ne.s32.totalorder %s104, %s105
      %p117 = scmp.eq.s32.totalorder %s32, 1
      %p118 = por %p116, %p117
      %p120 = scmp.ne.s32.totalorder %s105, %s119
      %p121 = scmp.eq.s32.totalorder %s32, 0
      %p122 = por %p120, %p121
      %s124 = sadd.s32 %s123, 1
      %p127 = scmp.eq.s32.totalorder %s26, 1
      %p128 = scmp.ne.s32.totalorder %s123, %s125
      %p129 = scmp.eq.s32.totalorder %s26, 0
      %p130 = por %p128, %p129
      %p131 = scmp.ne.s32.totalorder %s123, %s125
      %p132 = scmp.eq.s32.totalorder %s31, 1
      %p133 = por %p131, %p132
      %p134 = scmp.ne.s32.totalorder %s125, %s126
      %p135 = scmp.eq.s32.totalorder %s31, 0
      %p136 = por %p134, %p135
      %p137 = scmp.ne.s32.totalorder %s125, %s126
      %p138 = scmp.eq.s32.totalorder %s32, 1
      %p139 = por %p137, %p138
      %p141 = scmp.ne.s32.totalorder %s126, %s140
      %p142 = scmp.eq.s32.totalorder %s32, 0
      %p143 = por %p141, %p142
      %s145 = sadd.s32 %s144, 1
      %p148 = scmp.eq.s32.totalorder %s26, 1
      %p149 = scmp.ne.s32.totalorder %s144, %s146
      %p150 = scmp.eq.s32.totalorder %s26, 0
      %p151 = por %p149, %p150
      %p152 = scmp.ne.s32.totalorder %s144, %s146
      %p153 = scmp.eq.s32.totalorder %s31, 1
      %p154 = por %p152, %p153
      %p155 = scmp.ne.s32.totalorder %s146, %s147
      %p156 = scmp.eq.s32.totalorder %s31, 0
      %p157 = por %p155, %p156
      %p158 = scmp.ne.s32.totalorder %s146, %s147
      %p159 = scmp.eq.s32.totalorder %s32, 1
      %p160 = por %p158, %p159
      %p162 = scmp.ne.s32.totalorder %s147, %s161
      %p163 = scmp.eq.s32.totalorder %s32, 0
      %p164 = por %p162, %p163
      %s166 = sadd.s32 %s165, 1
      %p169 = scmp.eq.s32.totalorder %s26, 1
      %p170 = scmp.ne.s32.totalorder %s165, %s167
      %p171 = scmp.eq.s32.totalorder %s26, 0
      %p172 = por %p170, %p171
      %p173 = scmp.ne.s32.totalorder %s165, %s167
      %p174 = scmp.eq.s32.totalorder %s31, 1
      %p175 = por %p173, %p174
      %p176 = scmp.ne.s32.totalorder %s167, %s168
      %p177 = scmp.eq.s32.totalorder %s31, 0
      %p178 = por %p176, %p177
      %p179 = scmp.ne.s32.totalorder %s167, %s168
      %p180 = scmp.eq.s32.totalorder %s32, 1
      %p181 = por %p179, %p180
      %p183 = scmp.ne.s32.totalorder %s168, %s182
      %p184 = scmp.eq.s32.totalorder %s32, 0
      %p185 = por %p183, %p184
      %s187 = sadd.s32 %s186, 1
      %p190 = scmp.eq.s32.totalorder %s26, 1
      %p191 = scmp.ne.s32.totalorder %s186, %s188
      %p192 = scmp.eq.s32.totalorder %s26, 0
      %p193 = por %p191, %p192
      %p194 = scmp.ne.s32.totalorder %s186, %s188
      %p195 = scmp.eq.s32.totalorder %s31, 1
      %p196 = por %p194, %p195
      %p197 = scmp.ne.s32.totalorder %s188, %s189
      %p198 = scmp.eq.s32.totalorder %s31, 0
      %p199 = por %p197, %p198
      %p200 = scmp.ne.s32.totalorder %s188, %s189
      %p201 = scmp.eq.s32.totalorder %s32, 1
      %p202 = por %p200, %p201
      %p204 = scmp.ne.s32.totalorder %s189, %s203
      %p205 = scmp.eq.s32.totalorder %s32, 0
      %p206 = por %p204, %p205
      %s208 = sadd.s32 %s207, 1
      %p211 = scmp.eq.s32.totalorder %s26, 1
      %p212 = scmp.ne.s32.totalorder %s207, %s209
      %p213 = scmp.eq.s32.totalorder %s26, 0
      %p214 = por %p212, %p213
      %p215 = scmp.ne.s32.totalorder %s207, %s209
      %p216 = scmp.eq.s32.totalorder %s31, 1
      %p217 = por %p215, %p216
      %p218 = scmp.ne.s32.totalorder %s209, %s210
      %p219 = scmp.eq.s32.totalorder %s31, 0
      %p220 = por %p218, %p219
      %p221 = scmp.ne.s32.totalorder %s209, %s210
      %p222 = scmp.eq.s32.totalorder %s32, 1
      %p223 = por %p221, %p222
      %p225 = scmp.ne.s32.totalorder %s210, %s224
      %p226 = scmp.eq.s32.totalorder %s32, 0
      %p227 = por %p225, %p226
      %s229 = sadd.s32 %s228, 1
      %p232 = scmp.eq.s32.totalorder %s26, 1
      %p233 = scmp.ne.s32.totalorder %s228, %s230
      %p234 = scmp.eq.s32.totalorder %s26, 0
      %p235 = por %p233, %p234
      %p236 = scmp.ne.s32.totalorder %s228, %s230
      %p237 = scmp.eq.s32.totalorder %s31, 1
      %p238 = por %p236, %p237
      %p239 = scmp.ne.s32.totalorder %s230, %s231
      %p240 = scmp.eq.s32.totalorder %s31, 0
      %p241 = por %p239, %p240
      %p242 = scmp.ne.s32.totalorder %s230, %s231
      %p243 = scmp.eq.s32.totalorder %s32, 1
      %p244 = por %p242, %p243
      %p246 = scmp.ne.s32.totalorder %s231, %s245
      %p247 = scmp.eq.s32.totalorder %s32, 0
      %p248 = por %p246, %p247
      %s250 = sadd.s32 %s249, 1
      %p253 = scmp.eq.s32.totalorder %s26, 1
      %p254 = scmp.ne.s32.totalorder %s249, %s251
      %p255 = scmp.eq.s32.totalorder %s26, 0
      %p256 = por %p254, %p255
      %p257 = scmp.ne.s32.totalorder %s249, %s251
      %p258 = scmp.eq.s32.totalorder %s31, 1
      %p259 = por %p257, %p258
      %p260 = scmp.ne.s32.totalorder %s251, %s252
      %p261 = scmp.eq.s32.totalorder %s31, 0
      %p262 = por %p260, %p261
      %p263 = scmp.ne.s32.totalorder %s251, %s252
      %p264 = scmp.eq.s32.totalorder %s32, 1
      %p265 = por %p263, %p264
      %p267 = scmp.ne.s32.totalorder %s252, %s266
      %p268 = scmp.eq.s32.totalorder %s32, 0
      %p269 = por %p267, %p268
      %s270 = ssub.s32 %s26, %s33
      %p271 = scmp.eq.s32.totalorder %s270, 0
      %s273 = sadd.s32 %s272, 1
      %s274 = scalar_select %p271, %s272, %s273
      %p277 = pneg %p271
      %p278 = scmp.eq.s32.totalorder %s26, 1
      %p279 = por %p277, %p278
      %p280 = scmp.ne.s32.totalorder %s272, %s275
      %p281 = scmp.eq.s32.totalorder %s26, 0
      %p282 = por %p280, %p281
      %p283 = scmp.ne.s32.totalorder %s272, %s275
      %p284 = scmp.eq.s32.totalorder %s31, 1
      %p285 = por %p283, %p284
      %p286 = scmp.ne.s32.totalorder %s275, %s276
      %p287 = scmp.eq.s32.totalorder %s31, 0
      %p288 = por %p286, %p287
      %p289 = scmp.ne.s32.totalorder %s275, %s276
      %p290 = scmp.eq.s32.totalorder %s32, 1
      %p291 = por %p289, %p290
      %p293 = scmp.ne.s32.totalorder %s276, %s292
      %p294 = scmp.eq.s32.totalorder %s32, 0
      %p295 = por %p293, %p294
      %p296 = scmp.le.s32.totalorder 1, %s26
      %p297 = scmp.lt.s32.totalorder %s26, 3
      %p298 = pnand %p296, %p297
      %p299 = pneg %p298
      // Predicated region
      $region9: #{tpu_custom_call.1} parent=5 // pred_check
        _
      $region10: #{tpu_custom_call.1} parent=5 // pred_check_branch
        %301 = sbr.rel (%p298) target = $region12
      $region11: #{tpu_custom_call.1} parent=5 // pred_region
        %s302 = ssub.s32 %s26, 1
        // Predicated region
        $region13: #{tpu_custom_call.1} parent=11 // pred_check
          %p303 = pneg %p73
        $region14: #{tpu_custom_call.1} parent=11 // pred_check_branch
          %305 = sbr.rel (%p303) target = $region16
        $region15: #{tpu_custom_call.1} parent=11 // pred_region
          %307 = vsyncadd [#allocation6], 0
          %s309 = sshll.u32 %s1, 4
          %s310 = int_to_ptr.hbm [resolvable:$true] %s309
          %s311 = sshll.u32 [#allocation5], 4
          %s312 = int_to_ptr.vmem [resolvable:$true] %s311
          %314 = dma.hbm_to_vmem [thread:$0]  %s310, 16, %s312, [#allocation6]
        $region16: #{tpu_custom_call.1} parent=11 // pred_fallthru
          _
        // Predicated region
        $region17: #{tpu_custom_call.1} parent=11 // pred_check
          %p315 = pneg %p94
        $region18: #{tpu_custom_call.1} parent=11 // pred_check_branch
          %317 = sbr.rel (%p315) target = $region20
        $region19: #{tpu_custom_call.1} parent=11 // pred_region
          _
        $region20: #{tpu_custom_call.1} parent=11 // pred_fallthru
          _
        // Predicated region
        $region21: #{tpu_custom_call.1} parent=11 // pred_check
          %p318 = pneg %p115
        $region22: #{tpu_custom_call.1} parent=11 // pred_check_branch
          %320 = sbr.rel (%p318) target = $region24
        $region23: #{tpu_custom_call.1} parent=11 // pred_region
          %322 = vsyncadd [#allocation6], 0
          %s323 = sshll.u32 %s3, 4
          %s324 = int_to_ptr.hbm [resolvable:$true] %s323
          %s325 = sshll.u32 [#allocation7], 4
          %s326 = int_to_ptr.vmem [resolvable:$true] %s325
          %331 = dma.hbm_to_vmem [thread:$0]  %s324, 1024, %s326, [#allocation6], 64, 64, 4
        $region24: #{tpu_custom_call.1} parent=11 // pred_fallthru
          _
        // Predicated region
        $region25: #{tpu_custom_call.1} parent=11 // pred_check
          %p332 = pneg %p136
        $region26: #{tpu_custom_call.1} parent=11 // pred_check_branch
          %334 = sbr.rel (%p332) target = $region28
        $region27: #{tpu_custom_call.1} parent=11 // pred_region
          _
        $region28: #{tpu_custom_call.1} parent=11 // pred_fallthru
          _
        // Predicated region
        $region29: #{tpu_custom_call.1} parent=11 // pred_check
          %p335 = pneg %p157
        $region30: #{tpu_custom_call.1} parent=11 // pred_check_branch
          %337 = sbr.rel (%p335) target = $region32
        $region31: #{tpu_custom_call.1} parent=11 // pred_region
          %339 = vsyncadd [#allocation9], 0
          %s340 = sshll.u32 %s5, 4
          %s341 = int_to_ptr.hbm [resolvable:$true] %s340
          %s342 = sshll.u32 [#allocation8], 4
          %s343 = int_to_ptr.vmem [resolvable:$true] %s342
          %348 = dma.hbm_to_vmem [thread:$0]  %s341, 1024, %s343, [#allocation9], 64, 64, 4
        $region32: #{tpu_custom_call.1} parent=11 // pred_fallthru
          _
        // Predicated region
        $region33: #{tpu_custom_call.1} parent=11 // pred_check
          %p349 = pneg %p178
        $region34: #{tpu_custom_call.1} parent=11 // pred_check_branch
          %351 = sbr.rel (%p349) target = $region36
        $region35: #{tpu_custom_call.1} parent=11 // pred_region
          _
        $region36: #{tpu_custom_call.1} parent=11 // pred_fallthru
          _
        // Predicated region
        $region37: #{tpu_custom_call.1} parent=11 // pred_check
          %p352 = pneg %p199
        $region38: #{tpu_custom_call.1} parent=11 // pred_check_branch
          %354 = sbr.rel (%p352) target = $region40
        $region39: #{tpu_custom_call.1} parent=11 // pred_region
          %356 = vsyncadd [#allocation9], 0
          %s357 = sshll.u32 %s7, 4
          %s358 = int_to_ptr.hbm [resolvable:$true] %s357
          %s359 = sshll.u32 [#allocation10], 4
          %s360 = int_to_ptr.vmem [resolvable:$true] %s359
          %365 = dma.hbm_to_vmem [thread:$0]  %s358, 1024, %s360, [#allocation9], 64, 64, 4
        $region40: #{tpu_custom_call.1} parent=11 // pred_fallthru
          _
        // Predicated region
        $region41: #{tpu_custom_call.1} parent=11 // pred_check
          %p366 = pneg %p220
        $region42: #{tpu_custom_call.1} parent=11 // pred_check_branch
          %368 = sbr.rel (%p366) target = $region44
        $region43: #{tpu_custom_call.1} parent=11 // pred_region
          _
        $region44: #{tpu_custom_call.1} parent=11 // pred_fallthru
          _
        // Predicated region
        $region45: #{tpu_custom_call.1} parent=11 // pred_check
          %p369 = pneg %p241
        $region46: #{tpu_custom_call.1} parent=11 // pred_check_branch
          %371 = sbr.rel (%p369) target = $region48
        $region47: #{tpu_custom_call.1} parent=11 // pred_region
          %373 = vsyncadd [#allocation12], 0
          %s374 = sshll.u32 %s9, 4
          %s375 = int_to_ptr.hbm [resolvable:$true] %s374
          %s376 = sshll.u32 [#allocation11], 4
          %s377 = int_to_ptr.vmem [resolvable:$true] %s376
          %382 = dma.hbm_to_vmem [thread:$0]  %s375, 1024, %s377, [#allocation12], 64, 64, 4
        $region48: #{tpu_custom_call.1} parent=11 // pred_fallthru
          _
        // Predicated region
        $region49: #{tpu_custom_call.1} parent=11 // pred_check
          %p383 = pneg %p262
        $region50: #{tpu_custom_call.1} parent=11 // pred_check_branch
          %385 = sbr.rel (%p383) target = $region52
        $region51: #{tpu_custom_call.1} parent=11 // pred_region
          _
        $region52: #{tpu_custom_call.1} parent=11 // pred_fallthru
          _
      $region12: #{tpu_custom_call.1} parent=5 // pred_fallthru
        _
      %p386 = scmp.lt.s32.totalorder %s26, 2
      // Predicated region
      $region53: #{tpu_custom_call.1} parent=5 // pred_check
        %p387 = pneg %p386
      $region54: #{tpu_custom_call.1} parent=5 // pred_check_branch
        %389 = sbr.rel (%p387) target = $region56
      $region55: #{tpu_custom_call.1} parent=5 // pred_region
        // Predicated region
        $region57: #{tpu_custom_call.1} parent=55 // pred_check
          %p390 = pneg %p46
        $region58: #{tpu_custom_call.1} parent=55 // pred_check_branch
          %392 = sbr.rel (%p390) target = $region60
        $region59: #{tpu_custom_call.1} parent=55 // pred_region
          %s393 = sand.u32 %s36, 1
          %s394 = scalar_lea.sflag [#allocation3], %s393
          %s395 = sand.u32 %s36, 1
          %s396 = smul.addr %s395, 16
          %s397 = scalar_lea.vmem [#allocation2], %s396
          %s398 = smul.u32 4, %s26
          %400 = vsyncadd %s394, 0
          %s401 = smul.addr %s398, 4
          %s402 = scalar_lea.hbm %s0, %s401
          %s403 = sshll.u32 %s402, 4
          %s404 = int_to_ptr.hbm [resolvable:$true] %s403
          %s405 = sshll.u32 %s397, 4
          %s406 = int_to_ptr.vmem [resolvable:$true] %s405
          %411 = dma.hbm_to_vmem [thread:$0]  %s404, 256, %s406, %s394, 64, 64, 4
        $region60: #{tpu_custom_call.1} parent=55 // pred_fallthru
          _
      $region56: #{tpu_custom_call.1} parent=5 // pred_fallthru
        _
      %p412 = scmp.le.s32.totalorder 1, %s26
      %p413 = scmp.lt.s32.totalorder %s26, 3
      %p414 = pnand %p412, %p413
      %p415 = pneg %p414
      // Predicated region
      $region61: #{tpu_custom_call.1} parent=5 // pred_check
        _
      $region62: #{tpu_custom_call.1} parent=5 // pred_check_branch
        %417 = sbr.rel (%p414) target = $region64
      $region63: #{tpu_custom_call.1} parent=5 // pred_region
        %s418 = ssub.s32 %s26, 1
        %s419 = sand.u32 %s39, 1
        %s420 = scalar_lea.sflag [#allocation3], %s419
        %s421 = sand.u32 %s39, 1
        %s422 = smul.addr %s421, 16
        %s423 = scalar_lea.vmem [#allocation2], %s422
        // Predicated region
        $region65: #{tpu_custom_call.1} parent=63 // pred_check
          %p424 = pneg %p52
        $region66: #{tpu_custom_call.1} parent=63 // pred_check_branch
          %426 = sbr.rel (%p424) target = $region68
        $region67: #{tpu_custom_call.1} parent=63 // pred_region
          %428 = dma.done %s420, 256
        $region68: #{tpu_custom_call.1} parent=63 // pred_fallthru
          _
        // Predicated region
        $region69: #{tpu_custom_call.1} parent=63 // pred_check
          %p429 = pneg %p73
        $region70: #{tpu_custom_call.1} parent=63 // pred_check_branch
          %431 = sbr.rel (%p429) target = $region72
        $region71: #{tpu_custom_call.1} parent=63 // pred_region
          %433 = dma.done [#allocation6], 16
        $region72: #{tpu_custom_call.1} parent=63 // pred_fallthru
          _
        // Predicated region
        $region73: #{tpu_custom_call.1} parent=63 // pred_check
          %p434 = pneg %p115
        $region74: #{tpu_custom_call.1} parent=63 // pred_check_branch
          %436 = sbr.rel (%p434) target = $region76
        $region75: #{tpu_custom_call.1} parent=63 // pred_region
          %438 = dma.done [#allocation6], 1024
        $region76: #{tpu_custom_call.1} parent=63 // pred_fallthru
          _
        // Predicated region
        $region77: #{tpu_custom_call.1} parent=63 // pred_check
          %p439 = pneg %p157
        $region78: #{tpu_custom_call.1} parent=63 // pred_check_branch
          %441 = sbr.rel (%p439) target = $region80
        $region79: #{tpu_custom_call.1} parent=63 // pred_region
          %443 = dma.done [#allocation9], 1024
        $region80: #{tpu_custom_call.1} parent=63 // pred_fallthru
          _
        // Predicated region
        $region81: #{tpu_custom_call.1} parent=63 // pred_check
          %p444 = pneg %p199
        $region82: #{tpu_custom_call.1} parent=63 // pred_check_branch
          %446 = sbr.rel (%p444) target = $region84
        $region83: #{tpu_custom_call.1} parent=63 // pred_region
          %448 = dma.done [#allocation9], 1024
        $region84: #{tpu_custom_call.1} parent=63 // pred_fallthru
          _
        // Predicated region
        $region85: #{tpu_custom_call.1} parent=63 // pred_check
          %p449 = pneg %p241
        $region86: #{tpu_custom_call.1} parent=63 // pred_check_branch
          %451 = sbr.rel (%p449) target = $region88
        $region87: #{tpu_custom_call.1} parent=63 // pred_region
          %453 = dma.done [#allocation12], 1024
        $region88: #{tpu_custom_call.1} parent=63 // pred_fallthru
          _
        %s454 = sand.u32 %s39, 1
        %s455 = scalar_lea.sflag [#allocation3], %s454
        %s456 = sand.u32 %s39, 1
        %s457 = smul.addr %s456, 16
        %s458 = scalar_lea.vmem [#allocation2], %s457
        %p459 = pneg %p52
        %p460 = pneg %p49
        %p461 = pneg %p73
        %p462 = pneg %p70
        %p463 = pneg %p94
        %p464 = pneg %p91
        %p465 = pneg %p115
        %p466 = pneg %p112
        %p467 = pneg %p136
        %p468 = pneg %p133
        %p469 = pneg %p157
        %p470 = pneg %p154
        %p471 = pneg %p178
        %p472 = pneg %p175
        %p473 = pneg %p199
        %p474 = pneg %p196
        %p475 = pneg %p220
        %p476 = pneg %p217
        %p477 = pneg %p241
        %p478 = pneg %p238
        %p479 = pneg %p262
        %p480 = pneg %p259
        %p481 = pneg %p288
        %p482 = pneg %p285
        %s483 = sand.u32 %s275, 1
        %s484 = scalar_lea.sflag [#allocation4], %s483
        %s485 = sand.u32 %s275, 1
        %s486 = smul.addr %s485, 32
        %s487 = scalar_lea.vmem [#allocation13], %s486
        %s488 = smul.u32 4, %s31
        %s489 = smul.u32 4, %s31
        %v490 = vld [vmem:[#allocation5] sm:$0x1]
        %v491 = vld [vmem:[%s2] sm:$0x1]
        %v492 = vld [vmem:[#allocation7] sm:$0xf]
        %v493 = vld [vmem:[#allocation7 + $0x4] sm:$0xf]
        %v494 = vld [vmem:[#allocation7 + $0x8] sm:$0xf]
        %v495 = vld [vmem:[#allocation7 + $0xc] sm:$0xf]
        %v496 = vld [vmem:[#allocation7 + $0x10] sm:$0xf]
        %v497 = vld [vmem:[#allocation7 + $0x14] sm:$0xf]
        %v498 = vld [vmem:[#allocation7 + $0x18] sm:$0xf]
        %v499 = vld [vmem:[#allocation7 + $0x1c] sm:$0xf]
        %v500 = vld [vmem:[#allocation7 + $0x20] sm:$0xf]
        %v501 = vld [vmem:[#allocation7 + $0x24] sm:$0xf]
        %v502 = vld [vmem:[#allocation7 + $0x28] sm:$0xf]
        %v503 = vld [vmem:[#allocation7 + $0x2c] sm:$0xf]
        %v504 = vld [vmem:[#allocation7 + $0x30] sm:$0xf]
        %v505 = vld [vmem:[#allocation7 + $0x34] sm:$0xf]
        %v506 = vld [vmem:[#allocation7 + $0x38] sm:$0xf]
        %v507 = vld [vmem:[#allocation7 + $0x3c] sm:$0xf]
        %v508 = vld [vmem:[%s4] sm:$0x1]
        %v509 = vld [vmem:[%s423] sm:$0xf]
        %v510 = vld [vmem:[%s423 + $0x4] sm:$0xf]
        %v511 = vld [vmem:[%s423 + $0x8] sm:$0xf]
        %v512 = vld [vmem:[%s423 + $0xc] sm:$0xf]
        %v514 = vperm.slane %v508, 0
        %v520 = vunpack.c.l.b16 %v509
        %v521 = vunpack.c.l.b16 %v510
        %v522 = vunpack.c.l.b16 %v511
        %v523 = vunpack.c.l.b16 %v512
        %v524 = vpack.c.b16 %v521, %v520
        %v525 = vpack.c.b16 %v523, %v522
        %v544 = vunpack.c.l.b16 %v492
        %v545 = vunpack.c.l.b16 %v493
        %v546 = vunpack.c.l.b16 %v494
        %v547 = vunpack.c.l.b16 %v495
        %v548 = vunpack.c.l.b16 %v496
        %v549 = vunpack.c.l.b16 %v497
        %v550 = vunpack.c.l.b16 %v498
        %v551 = vunpack.c.l.b16 %v499
        %v552 = vunpack.c.l.b16 %v500
        %v553 = vunpack.c.l.b16 %v501
        %v554 = vunpack.c.l.b16 %v502
        %v555 = vunpack.c.l.b16 %v503
        %v556 = vunpack.c.l.b16 %v504
        %v557 = vunpack.c.l.b16 %v505
        %v558 = vunpack.c.l.b16 %v506
        %v559 = vunpack.c.l.b16 %v507
        %v560 = vpack.c.b16 %v545, %v544
        %v561 = vpack.c.b16 %v547, %v546
        %v562 = vpack.c.b16 %v549, %v548
        %v563 = vpack.c.b16 %v551, %v550
        %v564 = vpack.c.b16 %v553, %v552
        %v565 = vpack.c.b16 %v555, %v554
        %v566 = vpack.c.b16 %v557, %v556
        %v567 = vpack.c.b16 %v559, %v558
        %576 = vmatpush.bf16.msra.mxu0 %v567
        %577 = vmatpush.bf16.msra.mxu0 %v566
        %578 = vmatpush.bf16.msra.mxu0 %v565
        %579 = vmatpush.bf16.msra.mxu0 %v564
        %580 = vmatpush.bf16.msra.mxu0 %v563
        %581 = vmatpush.bf16.msra.mxu0 %v562
        %582 = vmatpush.bf16.msra.mxu0 %v561
        %583 = vmatpush.bf16.msra.mxu0 %v560
        %584 = vmatmul.bf16.gmra.mxu0 %v524
        %v585 = vpop.f32.mrf.mxu0
        %v586 = vadd.f32 %v514, %v585
        %v587 = vpop.f32.mrf.mxu0
        %v588 = vadd.f32 %v514, %v587
        %589 = vmatmul.bf16.gmra.mxu0 %v525
        %v590 = vpop.f32.mrf.mxu0
        %v591 = vadd.f32 %v514, %v590
        %v592 = vpop.f32.mrf.mxu0
        %v593 = vadd.f32 %v514, %v592
        %594 = vdwg.mxu0
        %v595 = vmax.f32 %v586, 0.0
        %v596 = vmax.f32 %v588, 0.0
        %v597 = vmax.f32 %v591, 0.0
        %v598 = vmax.f32 %v593, 0.0
        %v599 = vpack.c.bf16 %v596, %v595
        %v600 = vpack.c.bf16 %v598, %v597
        %v601 = vld [vmem:[#allocation8] sm:$0xf]
        %v602 = vld [vmem:[#allocation8 + $0x4] sm:$0xf]
        %v603 = vld [vmem:[#allocation8 + $0x8] sm:$0xf]
        %v604 = vld [vmem:[#allocation8 + $0xc] sm:$0xf]
        %v605 = vld [vmem:[#allocation8 + $0x10] sm:$0xf]
        %v606 = vld [vmem:[#allocation8 + $0x14] sm:$0xf]
        %v607 = vld [vmem:[#allocation8 + $0x18] sm:$0xf]
        %v608 = vld [vmem:[#allocation8 + $0x1c] sm:$0xf]
        %v609 = vld [vmem:[#allocation8 + $0x20] sm:$0xf]
        %v610 = vld [vmem:[#allocation8 + $0x24] sm:$0xf]
        %v611 = vld [vmem:[#allocation8 + $0x28] sm:$0xf]
        %v612 = vld [vmem:[#allocation8 + $0x2c] sm:$0xf]
        %v613 = vld [vmem:[#allocation8 + $0x30] sm:$0xf]
        %v614 = vld [vmem:[#allocation8 + $0x34] sm:$0xf]
        %v615 = vld [vmem:[#allocation8 + $0x38] sm:$0xf]
        %v616 = vld [vmem:[#allocation8 + $0x3c] sm:$0xf]
        %v617 = vld [vmem:[%s6] sm:$0x1]
        %v619 = vperm.slane %v617, 0
        %v637 = vunpack.c.l.b16 %v601
        %v638 = vunpack.c.l.b16 %v602
        %v639 = vunpack.c.l.b16 %v603
        %v640 = vunpack.c.l.b16 %v604
        %v641 = vunpack.c.l.b16 %v605
        %v642 = vunpack.c.l.b16 %v606
        %v643 = vunpack.c.l.b16 %v607
        %v644 = vunpack.c.l.b16 %v608
        %v645 = vunpack.c.l.b16 %v609
        %v646 = vunpack.c.l.b16 %v610
        %v647 = vunpack.c.l.b16 %v611
        %v648 = vunpack.c.l.b16 %v612
        %v649 = vunpack.c.l.b16 %v613
        %v650 = vunpack.c.l.b16 %v614
        %v651 = vunpack.c.l.b16 %v615
        %v652 = vunpack.c.l.b16 %v616
        %v653 = vpack.c.b16 %v638, %v637
        %v654 = vpack.c.b16 %v640, %v639
        %v655 = vpack.c.b16 %v642, %v641
        %v656 = vpack.c.b16 %v644, %v643
        %v657 = vpack.c.b16 %v646, %v645
        %v658 = vpack.c.b16 %v648, %v647
        %v659 = vpack.c.b16 %v650, %v649
        %v660 = vpack.c.b16 %v652, %v651
        %669 = vmatpush.bf16.msra.mxu0 %v660
        %670 = vmatpush.bf16.msra.mxu0 %v659
        %671 = vmatpush.bf16.msra.mxu0 %v658
        %672 = vmatpush.bf16.msra.mxu0 %v657
        %673 = vmatpush.bf16.msra.mxu0 %v656
        %674 = vmatpush.bf16.msra.mxu0 %v655
        %675 = vmatpush.bf16.msra.mxu0 %v654
        %676 = vmatpush.bf16.msra.mxu0 %v653
        %677 = vmatmul.bf16.gmra.mxu0 %v599
        %v678 = vpop.f32.mrf.mxu0
        %v679 = vadd.f32 %v619, %v678
        %v680 = vpop.f32.mrf.mxu0
        %v681 = vadd.f32 %v619, %v680
        %682 = vmatmul.bf16.gmra.mxu0 %v600
        %v683 = vpop.f32.mrf.mxu0
        %v684 = vadd.f32 %v619, %v683
        %v685 = vpop.f32.mrf.mxu0
        %v686 = vadd.f32 %v619, %v685
        %687 = vdwg.mxu0
        %688 = vadd.xlane.f32.xlu0 %v679
        %v689 = vpop.xlane.xlu0 %688
        %690 = vadd.xlane.f32.xlu0 %v681
        %v691 = vpop.xlane.xlu0 %690
        %692 = vadd.xlane.f32.xlu0 %v684
        %v693 = vpop.xlane.xlu0 %692
        %694 = vadd.xlane.f32.xlu0 %v686
        %v695 = vpop.xlane.xlu0 %694
        %v696 = vrcp.pop 128.0
        %v697 = vmul.f32 128.0, %v696
        %v698 = vsub.f32 1.0, %v697
        %v699 = vmul.f32 %v696, %v698
        %v700 = vadd.f32 %v696, %v699
        %vm701 = vweird.f32 %v696
        %v702 = vsel %vm701, %v696, %v700
        %v703 = vmul.f32 %v689, %v702
        %v704 = vmul.f32 %v691, %v702
        %v705 = vmul.f32 %v693, %v702
        %v706 = vmul.f32 %v695, %v702
        %v707 = vmul.f32 %v679, %v679
        %v708 = vmul.f32 %v681, %v681
        %v709 = vmul.f32 %v684, %v684
        %v710 = vmul.f32 %v686, %v686
        %711 = vadd.xlane.f32.xlu0 %v707
        %v712 = vpop.xlane.xlu0 %711
        %713 = vadd.xlane.f32.xlu0 %v708
        %v714 = vpop.xlane.xlu0 %713
        %715 = vadd.xlane.f32.xlu0 %v709
        %v716 = vpop.xlane.xlu0 %715
        %717 = vadd.xlane.f32.xlu0 %v710
        %v718 = vpop.xlane.xlu0 %717
        %v719 = vmul.f32 %v712, %v702
        %v720 = vmul.f32 %v714, %v702
        %v721 = vmul.f32 %v716, %v702
        %v722 = vmul.f32 %v718, %v702
        %v723 = vmul.f32 %v703, %v703
        %v724 = vmul.f32 %v704, %v704
        %v725 = vmul.f32 %v705, %v705
        %v726 = vmul.f32 %v706, %v706
        %v727 = vsub.f32 %v719, %v723
        %v728 = vsub.f32 %v720, %v724
        %v729 = vsub.f32 %v721, %v725
        %v730 = vsub.f32 %v722, %v726
        %v731 = vadd.f32 %v727, 1e-05
        %v732 = vadd.f32 %v728, 1e-05
        %v733 = vadd.f32 %v729, 1e-05
        %v734 = vadd.f32 %v730, 1e-05
        %v735 = vrsqrt.pop %v731
        %v736 = vmul.f32 %v735, %v731
        %v737 = vmul.f32 %v736, %v735
        %v738 = vmul.f32 0.5, %v737
        %v739 = vsub.f32 1.5, %v738
        %v740 = vmul.f32 %v735, %v739
        %vm741 = vweird.f32 %v731
        %vm742 = vweird.f32 %v735
        %vm743 = vmor %vm741, %vm742
        %v744 = vsel %vm743, %v735, %v740
        %v745 = vrsqrt.pop %v732
        %v746 = vmul.f32 %v745, %v732
        %v747 = vmul.f32 %v746, %v745
        %v748 = vmul.f32 0.5, %v747
        %v749 = vsub.f32 1.5, %v748
        %v750 = vmul.f32 %v745, %v749
        %vm751 = vweird.f32 %v732
        %vm752 = vweird.f32 %v745
        %vm753 = vmor %vm751, %vm752
        %v754 = vsel %vm753, %v745, %v750
        %v755 = vrsqrt.pop %v733
        %v756 = vmul.f32 %v755, %v733
        %v757 = vmul.f32 %v756, %v755
        %v758 = vmul.f32 0.5, %v757
        %v759 = vsub.f32 1.5, %v758
        %v760 = vmul.f32 %v755, %v759
        %vm761 = vweird.f32 %v733
        %vm762 = vweird.f32 %v755
        %vm763 = vmor %vm761, %vm762
        %v764 = vsel %vm763, %v755, %v760
        %v765 = vrsqrt.pop %v734
        %v766 = vmul.f32 %v765, %v734
        %v767 = vmul.f32 %v766, %v765
        %v768 = vmul.f32 0.5, %v767
        %v769 = vsub.f32 1.5, %v768
        %v770 = vmul.f32 %v765, %v769
        %vm771 = vweird.f32 %v734
        %vm772 = vweird.f32 %v765
        %vm773 = vmor %vm771, %vm772
        %v774 = vsel %vm773, %v765, %v770
        %v775 = vsub.f32 %v679, %v703
        %v776 = vsub.f32 %v681, %v704
        %v777 = vsub.f32 %v684, %v705
        %v778 = vsub.f32 %v686, %v706
        %v779 = vmul.f32 %v775, %v744
        %v780 = vmul.f32 %v776, %v754
        %v781 = vmul.f32 %v777, %v764
        %v782 = vmul.f32 %v778, %v774
        %v784 = vperm.slane %v490, 0
        %v786 = vmul.f32 %v779, %v784
        %v787 = vmul.f32 %v780, %v784
        %v788 = vmul.f32 %v781, %v784
        %v789 = vmul.f32 %v782, %v784
        %v791 = vperm.slane %v491, 0
        %v793 = vadd.f32 %v786, %v791
        %v794 = vadd.f32 %v787, %v791
        %v795 = vadd.f32 %v788, %v791
        %v796 = vadd.f32 %v789, %v791
        %v797 = vmax.f32 %v793, 0.0
        %v798 = vmax.f32 %v794, 0.0
        %v799 = vmax.f32 %v795, 0.0
        %v800 = vmax.f32 %v796, 0.0
        %v801 = vpack.c.bf16 %v798, %v797
        %v802 = vpack.c.bf16 %v800, %v799
        %v803 = vld [vmem:[#allocation10] sm:$0xf]
        %v804 = vld [vmem:[#allocation10 + $0x4] sm:$0xf]
        %v805 = vld [vmem:[#allocation10 + $0x8] sm:$0xf]
        %v806 = vld [vmem:[#allocation10 + $0xc] sm:$0xf]
        %v807 = vld [vmem:[#allocation10 + $0x10] sm:$0xf]
        %v808 = vld [vmem:[#allocation10 + $0x14] sm:$0xf]
        %v809 = vld [vmem:[#allocation10 + $0x18] sm:$0xf]
        %v810 = vld [vmem:[#allocation10 + $0x1c] sm:$0xf]
        %v811 = vld [vmem:[#allocation10 + $0x20] sm:$0xf]
        %v812 = vld [vmem:[#allocation10 + $0x24] sm:$0xf]
        %v813 = vld [vmem:[#allocation10 + $0x28] sm:$0xf]
        %v814 = vld [vmem:[#allocation10 + $0x2c] sm:$0xf]
        %v815 = vld [vmem:[#allocation10 + $0x30] sm:$0xf]
        %v816 = vld [vmem:[#allocation10 + $0x34] sm:$0xf]
        %v817 = vld [vmem:[#allocation10 + $0x38] sm:$0xf]
        %v818 = vld [vmem:[#allocation10 + $0x3c] sm:$0xf]
        %v819 = vld [vmem:[%s8] sm:$0x1]
        %v821 = vperm.slane %v819, 0
        %v839 = vunpack.c.l.b16 %v803
        %v840 = vunpack.c.l.b16 %v804
        %v841 = vunpack.c.l.b16 %v805
        %v842 = vunpack.c.l.b16 %v806
        %v843 = vunpack.c.l.b16 %v807
        %v844 = vunpack.c.l.b16 %v808
        %v845 = vunpack.c.l.b16 %v809
        %v846 = vunpack.c.l.b16 %v810
        %v847 = vunpack.c.l.b16 %v811
        %v848 = vunpack.c.l.b16 %v812
        %v849 = vunpack.c.l.b16 %v813
        %v850 = vunpack.c.l.b16 %v814
        %v851 = vunpack.c.l.b16 %v815
        %v852 = vunpack.c.l.b16 %v816
        %v853 = vunpack.c.l.b16 %v817
        %v854 = vunpack.c.l.b16 %v818
        %v855 = vpack.c.b16 %v840, %v839
        %v856 = vpack.c.b16 %v842, %v841
        %v857 = vpack.c.b16 %v844, %v843
        %v858 = vpack.c.b16 %v846, %v845
        %v859 = vpack.c.b16 %v848, %v847
        %v860 = vpack.c.b16 %v850, %v849
        %v861 = vpack.c.b16 %v852, %v851
        %v862 = vpack.c.b16 %v854, %v853
        %871 = vmatpush.bf16.msra.mxu0 %v862
        %872 = vmatpush.bf16.msra.mxu0 %v861
        %873 = vmatpush.bf16.msra.mxu0 %v860
        %874 = vmatpush.bf16.msra.mxu0 %v859
        %875 = vmatpush.bf16.msra.mxu0 %v858
        %876 = vmatpush.bf16.msra.mxu0 %v857
        %877 = vmatpush.bf16.msra.mxu0 %v856
        %878 = vmatpush.bf16.msra.mxu0 %v855
        %879 = vmatmul.bf16.gmra.mxu0 %v801
        %v880 = vpop.f32.mrf.mxu0
        %v881 = vadd.f32 %v821, %v880
        %v882 = vpop.f32.mrf.mxu0
        %v883 = vadd.f32 %v821, %v882
        %884 = vmatmul.bf16.gmra.mxu0 %v802
        %v885 = vpop.f32.mrf.mxu0
        %v886 = vadd.f32 %v821, %v885
        %v887 = vpop.f32.mrf.mxu0
        %v888 = vadd.f32 %v821, %v887
        %889 = vdwg.mxu0
        %890 = vadd.xlane.f32.xlu0 %v881
        %v891 = vpop.xlane.xlu0 %890
        %892 = vadd.xlane.f32.xlu0 %v883
        %v893 = vpop.xlane.xlu0 %892
        %894 = vadd.xlane.f32.xlu0 %v886
        %v895 = vpop.xlane.xlu0 %894
        %896 = vadd.xlane.f32.xlu0 %v888
        %v897 = vpop.xlane.xlu0 %896
        %v898 = vmul.f32 %v891, %v702
        %v899 = vmul.f32 %v893, %v702
        %v900 = vmul.f32 %v895, %v702
        %v901 = vmul.f32 %v897, %v702
        %v902 = vmul.f32 %v881, %v881
        %v903 = vmul.f32 %v883, %v883
        %v904 = vmul.f32 %v886, %v886
        %v905 = vmul.f32 %v888, %v888
        %906 = vadd.xlane.f32.xlu0 %v902
        %v907 = vpop.xlane.xlu0 %906
        %908 = vadd.xlane.f32.xlu0 %v903
        %v909 = vpop.xlane.xlu0 %908
        %910 = vadd.xlane.f32.xlu0 %v904
        %v911 = vpop.xlane.xlu0 %910
        %912 = vadd.xlane.f32.xlu0 %v905
        %v913 = vpop.xlane.xlu0 %912
        %v914 = vmul.f32 %v907, %v702
        %v915 = vmul.f32 %v909, %v702
        %v916 = vmul.f32 %v911, %v702
        %v917 = vmul.f32 %v913, %v702
        %v918 = vmul.f32 %v898, %v898
        %v919 = vmul.f32 %v899, %v899
        %v920 = vmul.f32 %v900, %v900
        %v921 = vmul.f32 %v901, %v901
        %v922 = vsub.f32 %v914, %v918
        %v923 = vsub.f32 %v915, %v919
        %v924 = vsub.f32 %v916, %v920
        %v925 = vsub.f32 %v917, %v921
        %v926 = vadd.f32 %v922, 1e-05
        %v927 = vadd.f32 %v923, 1e-05
        %v928 = vadd.f32 %v924, 1e-05
        %v929 = vadd.f32 %v925, 1e-05
        %v930 = vrsqrt.pop %v926
        %v931 = vmul.f32 %v930, %v926
        %v932 = vmul.f32 %v931, %v930
        %v933 = vmul.f32 0.5, %v932
        %v934 = vsub.f32 1.5, %v933
        %v935 = vmul.f32 %v930, %v934
        %vm936 = vweird.f32 %v926
        %vm937 = vweird.f32 %v930
        %vm938 = vmor %vm936, %vm937
        %v939 = vsel %vm938, %v930, %v935
        %v940 = vrsqrt.pop %v927
        %v941 = vmul.f32 %v940, %v927
        %v942 = vmul.f32 %v941, %v940
        %v943 = vmul.f32 0.5, %v942
        %v944 = vsub.f32 1.5, %v943
        %v945 = vmul.f32 %v940, %v944
        %vm946 = vweird.f32 %v927
        %vm947 = vweird.f32 %v940
        %vm948 = vmor %vm946, %vm947
        %v949 = vsel %vm948, %v940, %v945
        %v950 = vrsqrt.pop %v928
        %v951 = vmul.f32 %v950, %v928
        %v952 = vmul.f32 %v951, %v950
        %v953 = vmul.f32 0.5, %v952
        %v954 = vsub.f32 1.5, %v953
        %v955 = vmul.f32 %v950, %v954
        %vm956 = vweird.f32 %v928
        %vm957 = vweird.f32 %v950
        %vm958 = vmor %vm956, %vm957
        %v959 = vsel %vm958, %v950, %v955
        %v960 = vrsqrt.pop %v929
        %v961 = vmul.f32 %v960, %v929
        %v962 = vmul.f32 %v961, %v960
        %v963 = vmul.f32 0.5, %v962
        %v964 = vsub.f32 1.5, %v963
        %v965 = vmul.f32 %v960, %v964
        %vm966 = vweird.f32 %v929
        %vm967 = vweird.f32 %v960
        %vm968 = vmor %vm966, %vm967
        %v969 = vsel %vm968, %v960, %v965
        %v970 = vsub.f32 %v881, %v898
        %v971 = vsub.f32 %v883, %v899
        %v972 = vsub.f32 %v886, %v900
        %v973 = vsub.f32 %v888, %v901
        %v974 = vmul.f32 %v970, %v939
        %v975 = vmul.f32 %v971, %v949
        %v976 = vmul.f32 %v972, %v959
        %v977 = vmul.f32 %v973, %v969
        %v978 = vmul.f32 %v974, %v784
        %v979 = vmul.f32 %v975, %v784
        %v980 = vmul.f32 %v976, %v784
        %v981 = vmul.f32 %v977, %v784
        %v982 = vadd.f32 %v978, %v791
        %v983 = vadd.f32 %v979, %v791
        %v984 = vadd.f32 %v980, %v791
        %v985 = vadd.f32 %v981, %v791
        %v986 = vmax.f32 %v982, 0.0
        %v987 = vmax.f32 %v983, 0.0
        %v988 = vmax.f32 %v984, 0.0
        %v989 = vmax.f32 %v985, 0.0
        %v990 = vpack.c.bf16 %v987, %v986
        %v991 = vpack.c.bf16 %v989, %v988
        %v992 = vld [vmem:[#allocation11] sm:$0xf]
        %v993 = vld [vmem:[#allocation11 + $0x4] sm:$0xf]
        %v994 = vld [vmem:[#allocation11 + $0x8] sm:$0xf]
        %v995 = vld [vmem:[#allocation11 + $0xc] sm:$0xf]
        %v996 = vld [vmem:[#allocation11 + $0x10] sm:$0xf]
        %v997 = vld [vmem:[#allocation11 + $0x14] sm:$0xf]
        %v998 = vld [vmem:[#allocation11 + $0x18] sm:$0xf]
        %v999 = vld [vmem:[#allocation11 + $0x1c] sm:$0xf]
        %v1000 = vld [vmem:[#allocation11 + $0x20] sm:$0xf]
        %v1001 = vld [vmem:[#allocation11 + $0x24] sm:$0xf]
        %v1002 = vld [vmem:[#allocation11 + $0x28] sm:$0xf]
        %v1003 = vld [vmem:[#allocation11 + $0x2c] sm:$0xf]
        %v1004 = vld [vmem:[#allocation11 + $0x30] sm:$0xf]
        %v1005 = vld [vmem:[#allocation11 + $0x34] sm:$0xf]
        %v1006 = vld [vmem:[#allocation11 + $0x38] sm:$0xf]
        %v1007 = vld [vmem:[#allocation11 + $0x3c] sm:$0xf]
        %v1008 = vld [vmem:[%s10] sm:$0x1]
        %v1010 = vperm.slane %v1008, 0
        %v1028 = vunpack.c.l.b16 %v992
        %v1029 = vunpack.c.l.b16 %v993
        %v1030 = vunpack.c.l.b16 %v994
        %v1031 = vunpack.c.l.b16 %v995
        %v1032 = vunpack.c.l.b16 %v996
        %v1033 = vunpack.c.l.b16 %v997
        %v1034 = vunpack.c.l.b16 %v998
        %v1035 = vunpack.c.l.b16 %v999
        %v1036 = vunpack.c.l.b16 %v1000
        %v1037 = vunpack.c.l.b16 %v1001
        %v1038 = vunpack.c.l.b16 %v1002
        %v1039 = vunpack.c.l.b16 %v1003
        %v1040 = vunpack.c.l.b16 %v1004
        %v1041 = vunpack.c.l.b16 %v1005
        %v1042 = vunpack.c.l.b16 %v1006
        %v1043 = vunpack.c.l.b16 %v1007
        %v1044 = vpack.c.b16 %v1029, %v1028
        %v1045 = vpack.c.b16 %v1031, %v1030
        %v1046 = vpack.c.b16 %v1033, %v1032
        %v1047 = vpack.c.b16 %v1035, %v1034
        %v1048 = vpack.c.b16 %v1037, %v1036
        %v1049 = vpack.c.b16 %v1039, %v1038
        %v1050 = vpack.c.b16 %v1041, %v1040
        %v1051 = vpack.c.b16 %v1043, %v1042
        %1060 = vmatpush.bf16.msra.mxu0 %v1051
        %1061 = vmatpush.bf16.msra.mxu0 %v1050
        %1062 = vmatpush.bf16.msra.mxu0 %v1049
        %1063 = vmatpush.bf16.msra.mxu0 %v1048
        %1064 = vmatpush.bf16.msra.mxu0 %v1047
        %1065 = vmatpush.bf16.msra.mxu0 %v1046
        %1066 = vmatpush.bf16.msra.mxu0 %v1045
        %1067 = vmatpush.bf16.msra.mxu0 %v1044
        %1068 = vmatmul.bf16.gmra.mxu0 %v990
        %v1069 = vpop.f32.mrf.mxu0
        %v1070 = vadd.f32 %v1010, %v1069
        %v1071 = vpop.f32.mrf.mxu0
        %v1072 = vadd.f32 %v1010, %v1071
        %1073 = vmatmul.bf16.gmra.mxu0 %v991
        %v1074 = vpop.f32.mrf.mxu0
        %v1075 = vadd.f32 %v1010, %v1074
        %v1076 = vpop.f32.mrf.mxu0
        %v1077 = vadd.f32 %v1010, %v1076
        %1078 = vdwg.mxu0
        %1079 = vst [vmem:[%s487] sm:$0xff] %v1070
        %1080 = vst [vmem:[%s487 + $0x8] sm:$0xff] %v1072
        %1081 = vst [vmem:[%s487 + $0x10] sm:$0xff] %v1075
        %1082 = vst [vmem:[%s487 + $0x18] sm:$0xff] %v1077
        %s1083 = sand.u32 %s275, 1
        %s1084 = scalar_lea.sflag [#allocation4], %s1083
        %s1085 = sand.u32 %s275, 1
        %s1086 = smul.addr %s1085, 32
        %s1087 = scalar_lea.vmem [#allocation13], %s1086
        // Predicated region
        $region89: #{tpu_custom_call.1} parent=63 // pred_check
          %p1088 = pneg %p285
        $region90: #{tpu_custom_call.1} parent=63 // pred_check_branch
          %1090 = sbr.rel (%p1088) target = $region92
        $region91: #{tpu_custom_call.1} parent=63 // pred_region
          %s1091 = smul.u32 4, %s31
          %1093 = vsyncadd %s1084, 0
          %s1094 = smul.addr %s1091, 8
          %s1095 = scalar_lea.hbm %s11, %s1094
          %s1096 = sshll.u32 %s1087, 4
          %s1097 = int_to_ptr.vmem [resolvable:$true] %s1096
          %s1098 = sshll.u32 %s1095, 4
          %s1099 = int_to_ptr.hbm [resolvable:$true] %s1098
          %1104 = dma.vmem_to_hbm [thread:$0]  %s1097, 512, %s1099, %s1084, 128, 128, 8
        $region92: #{tpu_custom_call.1} parent=63 // pred_fallthru
          _
      $region64: #{tpu_custom_call.1} parent=5 // pred_fallthru
        _
      %p1105 = scmp.le.s32.totalorder 2, %s26
      // Predicated region
      $region93: #{tpu_custom_call.1} parent=5 // pred_check
        %p1106 = pneg %p1105
      $region94: #{tpu_custom_call.1} parent=5 // pred_check_branch
        %1108 = sbr.rel (%p1106) target = $region96
      $region95: #{tpu_custom_call.1} parent=5 // pred_region
        %s1109 = ssub.s32 %s26, 2
        // Predicated region
        $region97: #{tpu_custom_call.1} parent=95 // pred_check
          %p1110 = pneg %p291
        $region98: #{tpu_custom_call.1} parent=95 // pred_check_branch
          %1112 = sbr.rel (%p1110) target = $region100
        $region99: #{tpu_custom_call.1} parent=95 // pred_region
          %s1113 = sand.u32 %s276, 1
          %s1114 = scalar_lea.sflag [#allocation4], %s1113
          %s1115 = sand.u32 %s276, 1
          %s1116 = smul.addr %s1115, 32
          %s1117 = scalar_lea.vmem [#allocation13], %s1116
          %1119 = dma.done %s1114, 512
        $region100: #{tpu_custom_call.1} parent=95 // pred_fallthru
          _
      $region96: #{tpu_custom_call.1} parent=5 // pred_fallthru
        _
    $region6: #{tpu_custom_call.1} parent=1 // loop_footer
      %s30 = sadd.s32 1, %s26
    $region7: #{tpu_custom_call.1} parent=1 // loop_footer_branch
      %25 = sbr.rel target = $region3
    $region8: #{tpu_custom_call.1} parent=1 // loop_exit
      _
    %1120 = vsyncpa [#allocation3], 1
    %s1121 = scalar_lea.sflag [#allocation3], 1
    %1122 = vsyncpa %s1121, 1
    %1123 = vsyncpa [#allocation6], 1
    %1124 = vsyncpa [#allocation9], 1
    %1125 = vsyncpa [#allocation12], 1
    %1126 = vsyncpa [#allocation4], 1
    %s1127 = scalar_lea.sflag [#allocation4], 1
    %1128 = vsyncpa %s1127, 1

</llo_original>
